<compile_context>
chip_gen: v5e
topology: v5e:2x2
jax: 0.10.0
libtpu: 0.0.40
codegen_flags: <defaults>
</compile_context>

<pallas_src>
import math

import jax
import jax.numpy as jnp
import numpy as np
from jax.experimental import pallas as pl
from jax.experimental.pallas import tpu as pltpu

# ---- problem sizes (small, consistent with the module's forward) ----
BS = 2        # batch
SEQ = 8       # sequence length
DMODEL = 32   # model dim
HEADS = 4     # number of heads
D_K = 8       # per-head key/query dim
D_V = 8       # per-head value dim (module reshapes V with d_k, so d_v == d_k)


def mha_kernel(q_ref, k_ref, v_ref, mask_ref,
               wq_ref, bq_ref, wk_ref, bk_ref, wv_ref, bv_ref,
               wo_ref, bo_ref, gamma_ref, beta_ref,
               out_ref, attn_ref):
    """Single grid step == whole (tiny) problem.

    q_ref/k_ref/v_ref : (BS, SEQ, DMODEL)
    mask_ref          : (BS, SEQ, SEQ) int32 (0 = masked)
    wq/wk/wv          : (DMODEL, HEADS*D_K), biases (1, HEADS*D_K)
    wo                : (HEADS*D_V, DMODEL), bo (1, DMODEL)
    gamma/beta        : (1, DMODEL)
    out_ref           : (BS, SEQ, DMODEL)
    attn_ref          : (BS, SEQ, HEADS*SEQ)   # heads packed along lanes
    """
    # Fold batch into the sublane axis for all dense ops.
    x2 = q_ref[...].reshape(BS * SEQ, DMODEL)          # (16, 32) -- also the residual
    k2 = k_ref[...].reshape(BS * SEQ, DMODEL)
    v2 = v_ref[...].reshape(BS * SEQ, DMODEL)

    # Fused QKV projections: one MXU push each.
    qp = jnp.dot(x2, wq_ref[...], preferred_element_type=jnp.float32) + bq_ref[...]
    kp = jnp.dot(k2, wk_ref[...], preferred_element_type=jnp.float32) + bk_ref[...]
    vp = jnp.dot(v2, wv_ref[...], preferred_element_type=jnp.float32) + bv_ref[...]

    # Head-invariant additive mask bias, computed once.
    mask_bias = jnp.where(mask_ref[...] == 0,
                          jnp.float32(-1e9), jnp.float32(0.0))   # (BS, SEQ, SEQ)

    scale = 1.0 / math.sqrt(D_K)
    head_probs = []
    head_outs = []

    for h in range(HEADS):                               # static, fully unrolled
        lo = h * D_K
        qh = qp[:, lo:lo + D_K].reshape(BS, SEQ, D_K)    # (B, S, d_k)
        kh = kp[:, lo:lo + D_K].reshape(BS, SEQ, D_K)
        vh = vp[:, lo:lo + D_K].reshape(BS, SEQ, D_V)

        # Batched Q @ K^T via contraction on the last axis (no explicit transpose).
        logits = jnp.einsum('bqd,bkd->bqk', qh, kh,
                            preferred_element_type=jnp.float32) * scale + mask_bias

        # Numerically-stable softmax over the key axis.
        m = jnp.max(logits, axis=-1, keepdims=True)
        p = jnp.exp(logits - m)
        p = p * pl.reciprocal(jnp.sum(p, axis=-1, keepdims=True), approx=False)
        head_probs.append(p)

        head_outs.append(jnp.einsum('bqk,bkd->bqd', p, vh,
                                    preferred_element_type=jnp.float32))  # (B, S, d_v)

    # Single lane-dense store of all attention probabilities: (BS, SEQ, HEADS*SEQ).
    attn_ref[...] = jnp.concatenate(head_probs, axis=-1)

    # Fused output projection: concat heads along lanes -> one (16,32)@(32,32) dot.
    o2 = jnp.concatenate(head_outs, axis=-1).reshape(BS * SEQ, HEADS * D_V)
    y = jnp.dot(o2, wo_ref[...], preferred_element_type=jnp.float32) + bo_ref[...]
    # TODO(synk): nn.Dropout(0.2) -- identity here (eval-mode semantics).
    y = y + x2                                           # residual (residual = Q)

    # LayerNorm(dmodel, eps=1e-6)
    mean = jnp.mean(y, axis=-1, keepdims=True)
    var = jnp.mean((y - mean) ** 2, axis=-1, keepdims=True)
    y_norm = (y - mean) * jax.lax.rsqrt(var + 1e-6)
    out_ref[...] = (y_norm * gamma_ref[...] + beta_ref[...]).reshape(BS, SEQ, DMODEL)


def multi_head_attention(Q, K, V, attn_mask, params):
    wq, bq, wk, bk, wv, bv, wo, bo, gamma, beta = params

    vmem = pl.BlockSpec(memory_space=pltpu.MemorySpace.VMEM)

    out, attn_packed = pl.pallas_call(
        mha_kernel,
        out_shape=(
            jax.ShapeDtypeStruct((BS, SEQ, DMODEL), jnp.float32),
            jax.ShapeDtypeStruct((BS, SEQ, HEADS * SEQ), jnp.float32),
        ),
        in_specs=[vmem] * 14,
        out_specs=(vmem, vmem),
    )(Q, K, V, attn_mask, wq, bq, wk, bk, wv, bv, wo, bo, gamma, beta)

    # Unpack the lane-dense attention layout outside the kernel.
    attn = attn_packed.reshape(BS, SEQ, HEADS, SEQ).transpose(0, 2, 1, 3)
    return out, attn


def make_params(key):
    """Deterministic synthetic parameters (x @ W + b convention)."""
    ks = jax.random.split(key, 7)
    std = 0.02
    Wq = jax.random.normal(ks[0], (DMODEL, HEADS * D_K), jnp.float32) * std
    Wk = jax.random.normal(ks[1], (DMODEL, HEADS * D_K), jnp.float32) * std
    Wv = jax.random.normal(ks[2], (DMODEL, HEADS * D_V), jnp.float32) * std
    Wo = jax.random.normal(ks[3], (HEADS * D_V, DMODEL), jnp.float32) * std
    bq = jax.random.normal(ks[4], (HEADS * D_K,), jnp.float32) * std
    bk = jax.random.normal(ks[5], (HEADS * D_K,), jnp.float32) * std
    bv = jax.random.normal(ks[6], (HEADS * D_V,), jnp.float32) * std
    bo = jnp.zeros((DMODEL,), jnp.float32)
    gamma = jnp.ones((DMODEL,), jnp.float32)
    beta = jnp.zeros((DMODEL,), jnp.float32)

    flat = (Wq, bq, Wk, bk, Wv, bv, Wo, bo, gamma, beta)
    # Fused layout for the kernel (weights stay (32,32); biases become 2-D rows).
    kernel_params = (Wq, bq.reshape(1, -1),
                     Wk, bk.reshape(1, -1),
                     Wv, bv.reshape(1, -1),
                     Wo, bo.reshape(1, DMODEL),
                     gamma.reshape(1, DMODEL), beta.reshape(1, DMODEL))
    return flat, kernel_params


def reference_forward(Q, K, V, mask, flat):
    """Plain-JAX reference reproducing the PyTorch forward (eval mode)."""
    Wq, bq, Wk, bk, Wv, bv, Wo, bo, gamma, beta = flat
    residual = Q
    Q_ = (Q @ Wq + bq).reshape(BS, SEQ, HEADS, D_K).transpose(0, 2, 1, 3)
    K_ = (K @ Wk + bk).reshape(BS, SEQ, HEADS, D_K).transpose(0, 2, 1, 3)
    V_ = (V @ Wv + bv).reshape(BS, SEQ, HEADS, D_V).transpose(0, 2, 1, 3)
    attn = jnp.einsum('bhqd,bhkd->bhqk', Q_, K_) / math.sqrt(D_K)
    m = mask[:, None, :, :]
    attn = jnp.where(m == 0, -1e9, attn)
    attn = jax.nn.softmax(attn, axis=-1)
    out = jnp.einsum('bhqk,bhkd->bhqd', attn, V_).transpose(0, 2, 1, 3)
    out = out.reshape(BS, SEQ, HEADS * D_V) @ Wo + bo
    y = out + residual
    mean = jnp.mean(y, axis=-1, keepdims=True)
    var = jnp.mean((y - mean) ** 2, axis=-1, keepdims=True)
    y = (y - mean) / jnp.sqrt(var + 1e-6) * gamma + beta
    return y, attn


if __name__ == "__main__":
    key = jax.random.PRNGKey(0)
    kq, kk, kv, kp = jax.random.split(key, 4)

    Q = jax.random.normal(kq, (BS, SEQ, DMODEL), jnp.float32)
    K = jax.random.normal(kk, (BS, SEQ, DMODEL), jnp.float32)
    V = jax.random.normal(kv, (BS, SEQ, DMODEL), jnp.float32)
    # lower-triangular (causal) mask, 0 = masked
    attn_mask = jnp.tril(jnp.ones((SEQ, SEQ), jnp.int32))[None].repeat(BS, axis=0)

    flat, kernel_params = make_params(kp)

    out, attn = multi_head_attention(Q, K, V, attn_mask, kernel_params)
    out = jax.block_until_ready(out)
    attn = jax.block_until_ready(attn)

    ref_out, ref_attn = reference_forward(Q, K, V, attn_mask, flat)
    np.testing.assert_allclose(np.asarray(out), np.asarray(ref_out), atol=2e-4, rtol=2e-4)
    np.testing.assert_allclose(np.asarray(attn), np.asarray(ref_attn), atol=2e-4, rtol=2e-4)

    print("KERNEL_OK")
</pallas_src>

<mosaic_0001>
module attributes {stable_mosaic.version = 11 : i64} {
  func.func @mha_kernel(%arg0: memref<2x8x32xf32, #tpu.memory_space<vmem>>, %arg1: memref<2x8x32xf32, #tpu.memory_space<vmem>>, %arg2: memref<2x8x32xf32, #tpu.memory_space<vmem>>, %arg3: memref<2x8x8xi32, #tpu.memory_space<vmem>>, %arg4: memref<32x32xf32, #tpu.memory_space<vmem>>, %arg5: memref<1x32xf32, #tpu.memory_space<vmem>>, %arg6: memref<32x32xf32, #tpu.memory_space<vmem>>, %arg7: memref<1x32xf32, #tpu.memory_space<vmem>>, %arg8: memref<32x32xf32, #tpu.memory_space<vmem>>, %arg9: memref<1x32xf32, #tpu.memory_space<vmem>>, %arg10: memref<32x32xf32, #tpu.memory_space<vmem>>, %arg11: memref<1x32xf32, #tpu.memory_space<vmem>>, %arg12: memref<1x32xf32, #tpu.memory_space<vmem>>, %arg13: memref<1x32xf32, #tpu.memory_space<vmem>>, %arg14: memref<2x8x32xf32, #tpu.memory_space<vmem>>, %arg15: memref<2x8x32xf32, #tpu.memory_space<vmem>>) attributes {dimension_semantics = [], scalar_prefetch = 0 : i64, scratch_operands = 0 : i64, tpu.core_type = #tpu.core_type<tc>} {
    %c0 = arith.constant 0 : index
    %c0_0 = arith.constant 0 : index
    %c0_1 = arith.constant 0 : index
    %0 = vector.load %arg0[%c0, %c0_0, %c0_1] : memref<2x8x32xf32, #tpu.memory_space<vmem>>, vector<2x8x32xf32>
    %1 = vector.shape_cast %0 : vector<2x8x32xf32> to vector<16x32xf32>
    %c0_2 = arith.constant 0 : index
    %c0_3 = arith.constant 0 : index
    %c0_4 = arith.constant 0 : index
    %2 = vector.load %arg1[%c0_2, %c0_3, %c0_4] : memref<2x8x32xf32, #tpu.memory_space<vmem>>, vector<2x8x32xf32>
    %3 = vector.shape_cast %2 : vector<2x8x32xf32> to vector<16x32xf32>
    %c0_5 = arith.constant 0 : index
    %c0_6 = arith.constant 0 : index
    %c0_7 = arith.constant 0 : index
    %4 = vector.load %arg2[%c0_5, %c0_6, %c0_7] : memref<2x8x32xf32, #tpu.memory_space<vmem>>, vector<2x8x32xf32>
    %5 = vector.shape_cast %4 : vector<2x8x32xf32> to vector<16x32xf32>
    %c0_8 = arith.constant 0 : index
    %c0_9 = arith.constant 0 : index
    %6 = vector.load %arg4[%c0_8, %c0_9] : memref<32x32xf32, #tpu.memory_space<vmem>>, vector<32x32xf32>
    %cst = arith.constant dense<0.000000e+00> : vector<16x32xf32>
    %7 = tpu.matmul %1, %6, %cst {dimension_numbers = #tpu.dot_dimension_numbers<[1], [0], [0], [1], [0, 0, 1, 1], [], []>} : vector<16x32xf32>, vector<32x32xf32>, vector<16x32xf32> -> vector<16x32xf32>
    %c0_10 = arith.constant 0 : index
    %c0_11 = arith.constant 0 : index
    %8 = vector.load %arg5[%c0_10, %c0_11] : memref<1x32xf32, #tpu.memory_space<vmem>>, vector<1x32xf32>
    %9 = vector.broadcast %8 : vector<1x32xf32> to vector<16x32xf32>
    %10 = arith.addf %7, %9 : vector<16x32xf32>
    %c0_12 = arith.constant 0 : index
    %c0_13 = arith.constant 0 : index
    %11 = vector.load %arg6[%c0_12, %c0_13] : memref<32x32xf32, #tpu.memory_space<vmem>>, vector<32x32xf32>
    %cst_14 = arith.constant dense<0.000000e+00> : vector<16x32xf32>
    %12 = tpu.matmul %3, %11, %cst_14 {dimension_numbers = #tpu.dot_dimension_numbers<[1], [0], [0], [1], [0, 0, 1, 1], [], []>} : vector<16x32xf32>, vector<32x32xf32>, vector<16x32xf32> -> vector<16x32xf32>
    %c0_15 = arith.constant 0 : index
    %c0_16 = arith.constant 0 : index
    %13 = vector.load %arg7[%c0_15, %c0_16] : memref<1x32xf32, #tpu.memory_space<vmem>>, vector<1x32xf32>
    %14 = vector.broadcast %13 : vector<1x32xf32> to vector<16x32xf32>
    %15 = arith.addf %12, %14 : vector<16x32xf32>
    %c0_17 = arith.constant 0 : index
    %c0_18 = arith.constant 0 : index
    %16 = vector.load %arg8[%c0_17, %c0_18] : memref<32x32xf32, #tpu.memory_space<vmem>>, vector<32x32xf32>
    %cst_19 = arith.constant dense<0.000000e+00> : vector<16x32xf32>
    %17 = tpu.matmul %5, %16, %cst_19 {dimension_numbers = #tpu.dot_dimension_numbers<[1], [0], [0], [1], [0, 0, 1, 1], [], []>} : vector<16x32xf32>, vector<32x32xf32>, vector<16x32xf32> -> vector<16x32xf32>
    %c0_20 = arith.constant 0 : index
    %c0_21 = arith.constant 0 : index
    %18 = vector.load %arg9[%c0_20, %c0_21] : memref<1x32xf32, #tpu.memory_space<vmem>>, vector<1x32xf32>
    %19 = vector.broadcast %18 : vector<1x32xf32> to vector<16x32xf32>
    %20 = arith.addf %17, %19 : vector<16x32xf32>
    %c0_22 = arith.constant 0 : index
    %c0_23 = arith.constant 0 : index
    %c0_24 = arith.constant 0 : index
    %21 = vector.load %arg3[%c0_22, %c0_23, %c0_24] : memref<2x8x8xi32, #tpu.memory_space<vmem>>, vector<2x8x8xi32>
    %c0_i32 = arith.constant 0 : i32
    %22 = vector.broadcast %c0_i32 : i32 to vector<2x8x8xi32>
    %23 = arith.cmpi eq, %21, %22 : vector<2x8x8xi32>
    %cst_25 = arith.constant -1.000000e+09 : f32
    %cst_26 = arith.constant 0.000000e+00 : f32
    %24 = vector.broadcast %cst_25 : f32 to vector<2x8x8xf32>
    %25 = vector.broadcast %cst_26 : f32 to vector<2x8x8xf32>
    %26 = arith.select %23, %24, %25 : vector<2x8x8xi1>, vector<2x8x8xf32>
    %27 = vector.extract_strided_slice %10 {offsets = [0, 0], sizes = [16, 8], strides = [1, 1]} : vector<16x32xf32> to vector<16x8xf32>
    %28 = vector.shape_cast %27 : vector<16x8xf32> to vector<2x8x8xf32>
    %29 = vector.extract_strided_slice %15 {offsets = [0, 0], sizes = [16, 8], strides = [1, 1]} : vector<16x32xf32> to vector<16x8xf32>
    %30 = vector.shape_cast %29 : vector<16x8xf32> to vector<2x8x8xf32>
    %31 = vector.extract_strided_slice %20 {offsets = [0, 0], sizes = [16, 8], strides = [1, 1]} : vector<16x32xf32> to vector<16x8xf32>
    %32 = vector.shape_cast %31 : vector<16x8xf32> to vector<2x8x8xf32>
    "tpu.trace_start"() <{level = 10 : i32, message = "bqd,bkd->bqk"}> : () -> ()
    %cst_27 = arith.constant dense<0.000000e+00> : vector<2x8x8xf32>
    %33 = tpu.matmul %28, %30, %cst_27 {dimension_numbers = #tpu.dot_dimension_numbers<[2], [2], [1], [1], [0, 0, 0, 1, 1, 1], [0], [0]>} : vector<2x8x8xf32>, vector<2x8x8xf32>, vector<2x8x8xf32> -> vector<2x8x8xf32>
    "tpu.trace_stop"() : () -> ()
    %cst_28 = arith.constant 0.353553385 : f32
    %34 = vector.broadcast %cst_28 : f32 to vector<2x8x8xf32>
    %35 = arith.mulf %33, %34 : vector<2x8x8xf32>
    %36 = arith.addf %35, %26 : vector<2x8x8xf32>
    %cst_29 = arith.constant dense<0xFF800000> : vector<2x8xf32>
    %37 = vector.multi_reduction <maximumf>, %36, %cst_29 [2] : vector<2x8x8xf32> to vector<2x8xf32>
    %38 = vector.shape_cast %37 : vector<2x8xf32> to vector<2x8x1xf32>
    %39 = vector.broadcast %38 : vector<2x8x1xf32> to vector<2x8x8xf32>
    %40 = arith.subf %36, %39 : vector<2x8x8xf32>
    %41 = math.exp %40 : vector<2x8x8xf32>
    %cst_30 = arith.constant dense<0.000000e+00> : vector<2x8xf32>
    %42 = vector.multi_reduction <add>, %41, %cst_30 [2] : vector<2x8x8xf32> to vector<2x8xf32>
    %43 = vector.shape_cast %42 : vector<2x8xf32> to vector<2x8x1xf32>
    %44 = tpu.reciprocal %43 : vector<2x8x1xf32> -> vector<2x8x1xf32>
    %45 = vector.broadcast %44 : vector<2x8x1xf32> to vector<2x8x8xf32>
    %46 = arith.mulf %41, %45 : vector<2x8x8xf32>
    "tpu.trace_start"() <{level = 10 : i32, message = "bqk,bkd->bqd"}> : () -> ()
    %cst_31 = arith.constant dense<0.000000e+00> : vector<2x8x8xf32>
    %47 = tpu.matmul %46, %32, %cst_31 {dimension_numbers = #tpu.dot_dimension_numbers<[2], [1], [1], [2], [0, 0, 0, 1, 1, 2], [0], [0]>} : vector<2x8x8xf32>, vector<2x8x8xf32>, vector<2x8x8xf32> -> vector<2x8x8xf32>
    "tpu.trace_stop"() : () -> ()
    %48 = vector.extract_strided_slice %10 {offsets = [0, 8], sizes = [16, 8], strides = [1, 1]} : vector<16x32xf32> to vector<16x8xf32>
    %49 = vector.shape_cast %48 : vector<16x8xf32> to vector<2x8x8xf32>
    %50 = vector.extract_strided_slice %15 {offsets = [0, 8], sizes = [16, 8], strides = [1, 1]} : vector<16x32xf32> to vector<16x8xf32>
    %51 = vector.shape_cast %50 : vector<16x8xf32> to vector<2x8x8xf32>
    %52 = vector.extract_strided_slice %20 {offsets = [0, 8], sizes = [16, 8], strides = [1, 1]} : vector<16x32xf32> to vector<16x8xf32>
    %53 = vector.shape_cast %52 : vector<16x8xf32> to vector<2x8x8xf32>
    "tpu.trace_start"() <{level = 10 : i32, message = "bqd,bkd->bqk"}> : () -> ()
    %cst_32 = arith.constant dense<0.000000e+00> : vector<2x8x8xf32>
    %54 = tpu.matmul %49, %51, %cst_32 {dimension_numbers = #tpu.dot_dimension_numbers<[2], [2], [1], [1], [0, 0, 0, 1, 1, 1], [0], [0]>} : vector<2x8x8xf32>, vector<2x8x8xf32>, vector<2x8x8xf32> -> vector<2x8x8xf32>
    "tpu.trace_stop"() : () -> ()
    %cst_33 = arith.constant 0.353553385 : f32
    %55 = vector.broadcast %cst_33 : f32 to vector<2x8x8xf32>
    %56 = arith.mulf %54, %55 : vector<2x8x8xf32>
    %57 = arith.addf %56, %26 : vector<2x8x8xf32>
    %cst_34 = arith.constant dense<0xFF800000> : vector<2x8xf32>
    %58 = vector.multi_reduction <maximumf>, %57, %cst_34 [2] : vector<2x8x8xf32> to vector<2x8xf32>
    %59 = vector.shape_cast %58 : vector<2x8xf32> to vector<2x8x1xf32>
    %60 = vector.broadcast %59 : vector<2x8x1xf32> to vector<2x8x8xf32>
    %61 = arith.subf %57, %60 : vector<2x8x8xf32>
    %62 = math.exp %61 : vector<2x8x8xf32>
    %cst_35 = arith.constant dense<0.000000e+00> : vector<2x8xf32>
    %63 = vector.multi_reduction <add>, %62, %cst_35 [2] : vector<2x8x8xf32> to vector<2x8xf32>
    %64 = vector.shape_cast %63 : vector<2x8xf32> to vector<2x8x1xf32>
    %65 = tpu.reciprocal %64 : vector<2x8x1xf32> -> vector<2x8x1xf32>
    %66 = vector.broadcast %65 : vector<2x8x1xf32> to vector<2x8x8xf32>
    %67 = arith.mulf %62, %66 : vector<2x8x8xf32>
    "tpu.trace_start"() <{level = 10 : i32, message = "bqk,bkd->bqd"}> : () -> ()
    %cst_36 = arith.constant dense<0.000000e+00> : vector<2x8x8xf32>
    %68 = tpu.matmul %67, %53, %cst_36 {dimension_numbers = #tpu.dot_dimension_numbers<[2], [1], [1], [2], [0, 0, 0, 1, 1, 2], [0], [0]>} : vector<2x8x8xf32>, vector<2x8x8xf32>, vector<2x8x8xf32> -> vector<2x8x8xf32>
    "tpu.trace_stop"() : () -> ()
    %69 = vector.extract_strided_slice %10 {offsets = [0, 16], sizes = [16, 8], strides = [1, 1]} : vector<16x32xf32> to vector<16x8xf32>
    %70 = vector.shape_cast %69 : vector<16x8xf32> to vector<2x8x8xf32>
    %71 = vector.extract_strided_slice %15 {offsets = [0, 16], sizes = [16, 8], strides = [1, 1]} : vector<16x32xf32> to vector<16x8xf32>
    %72 = vector.shape_cast %71 : vector<16x8xf32> to vector<2x8x8xf32>
    %73 = vector.extract_strided_slice %20 {offsets = [0, 16], sizes = [16, 8], strides = [1, 1]} : vector<16x32xf32> to vector<16x8xf32>
    %74 = vector.shape_cast %73 : vector<16x8xf32> to vector<2x8x8xf32>
    "tpu.trace_start"() <{level = 10 : i32, message = "bqd,bkd->bqk"}> : () -> ()
    %cst_37 = arith.constant dense<0.000000e+00> : vector<2x8x8xf32>
    %75 = tpu.matmul %70, %72, %cst_37 {dimension_numbers = #tpu.dot_dimension_numbers<[2], [2], [1], [1], [0, 0, 0, 1, 1, 1], [0], [0]>} : vector<2x8x8xf32>, vector<2x8x8xf32>, vector<2x8x8xf32> -> vector<2x8x8xf32>
    "tpu.trace_stop"() : () -> ()
    %cst_38 = arith.constant 0.353553385 : f32
    %76 = vector.broadcast %cst_38 : f32 to vector<2x8x8xf32>
    %77 = arith.mulf %75, %76 : vector<2x8x8xf32>
    %78 = arith.addf %77, %26 : vector<2x8x8xf32>
    %cst_39 = arith.constant dense<0xFF800000> : vector<2x8xf32>
    %79 = vector.multi_reduction <maximumf>, %78, %cst_39 [2] : vector<2x8x8xf32> to vector<2x8xf32>
    %80 = vector.shape_cast %79 : vector<2x8xf32> to vector<2x8x1xf32>
    %81 = vector.broadcast %80 : vector<2x8x1xf32> to vector<2x8x8xf32>
    %82 = arith.subf %78, %81 : vector<2x8x8xf32>
    %83 = math.exp %82 : vector<2x8x8xf32>
    %cst_40 = arith.constant dense<0.000000e+00> : vector<2x8xf32>
    %84 = vector.multi_reduction <add>, %83, %cst_40 [2] : vector<2x8x8xf32> to vector<2x8xf32>
    %85 = vector.shape_cast %84 : vector<2x8xf32> to vector<2x8x1xf32>
    %86 = tpu.reciprocal %85 : vector<2x8x1xf32> -> vector<2x8x1xf32>
    %87 = vector.broadcast %86 : vector<2x8x1xf32> to vector<2x8x8xf32>
    %88 = arith.mulf %83, %87 : vector<2x8x8xf32>
    "tpu.trace_start"() <{level = 10 : i32, message = "bqk,bkd->bqd"}> : () -> ()
    %cst_41 = arith.constant dense<0.000000e+00> : vector<2x8x8xf32>
    %89 = tpu.matmul %88, %74, %cst_41 {dimension_numbers = #tpu.dot_dimension_numbers<[2], [1], [1], [2], [0, 0, 0, 1, 1, 2], [0], [0]>} : vector<2x8x8xf32>, vector<2x8x8xf32>, vector<2x8x8xf32> -> vector<2x8x8xf32>
    "tpu.trace_stop"() : () -> ()
    %90 = vector.extract_strided_slice %10 {offsets = [0, 24], sizes = [16, 8], strides = [1, 1]} : vector<16x32xf32> to vector<16x8xf32>
    %91 = vector.shape_cast %90 : vector<16x8xf32> to vector<2x8x8xf32>
    %92 = vector.extract_strided_slice %15 {offsets = [0, 24], sizes = [16, 8], strides = [1, 1]} : vector<16x32xf32> to vector<16x8xf32>
    %93 = vector.shape_cast %92 : vector<16x8xf32> to vector<2x8x8xf32>
    %94 = vector.extract_strided_slice %20 {offsets = [0, 24], sizes = [16, 8], strides = [1, 1]} : vector<16x32xf32> to vector<16x8xf32>
    %95 = vector.shape_cast %94 : vector<16x8xf32> to vector<2x8x8xf32>
    "tpu.trace_start"() <{level = 10 : i32, message = "bqd,bkd->bqk"}> : () -> ()
    %cst_42 = arith.constant dense<0.000000e+00> : vector<2x8x8xf32>
    %96 = tpu.matmul %91, %93, %cst_42 {dimension_numbers = #tpu.dot_dimension_numbers<[2], [2], [1], [1], [0, 0, 0, 1, 1, 1], [0], [0]>} : vector<2x8x8xf32>, vector<2x8x8xf32>, vector<2x8x8xf32> -> vector<2x8x8xf32>
    "tpu.trace_stop"() : () -> ()
    %cst_43 = arith.constant 0.353553385 : f32
    %97 = vector.broadcast %cst_43 : f32 to vector<2x8x8xf32>
    %98 = arith.mulf %96, %97 : vector<2x8x8xf32>
    %99 = arith.addf %98, %26 : vector<2x8x8xf32>
    %cst_44 = arith.constant dense<0xFF800000> : vector<2x8xf32>
    %100 = vector.multi_reduction <maximumf>, %99, %cst_44 [2] : vector<2x8x8xf32> to vector<2x8xf32>
    %101 = vector.shape_cast %100 : vector<2x8xf32> to vector<2x8x1xf32>
    %102 = vector.broadcast %101 : vector<2x8x1xf32> to vector<2x8x8xf32>
    %103 = arith.subf %99, %102 : vector<2x8x8xf32>
    %104 = math.exp %103 : vector<2x8x8xf32>
    %cst_45 = arith.constant dense<0.000000e+00> : vector<2x8xf32>
    %105 = vector.multi_reduction <add>, %104, %cst_45 [2] : vector<2x8x8xf32> to vector<2x8xf32>
    %106 = vector.shape_cast %105 : vector<2x8xf32> to vector<2x8x1xf32>
    %107 = tpu.reciprocal %106 : vector<2x8x1xf32> -> vector<2x8x1xf32>
    %108 = vector.broadcast %107 : vector<2x8x1xf32> to vector<2x8x8xf32>
    %109 = arith.mulf %104, %108 : vector<2x8x8xf32>
    "tpu.trace_start"() <{level = 10 : i32, message = "bqk,bkd->bqd"}> : () -> ()
    %cst_46 = arith.constant dense<0.000000e+00> : vector<2x8x8xf32>
    %110 = tpu.matmul %109, %95, %cst_46 {dimension_numbers = #tpu.dot_dimension_numbers<[2], [1], [1], [2], [0, 0, 0, 1, 1, 2], [0], [0]>} : vector<2x8x8xf32>, vector<2x8x8xf32>, vector<2x8x8xf32> -> vector<2x8x8xf32>
    "tpu.trace_stop"() : () -> ()
    %111 = tpu.concatenate %46, %67, %88, %109 in 2 : vector<2x8x8xf32>, vector<2x8x8xf32>, vector<2x8x8xf32>, vector<2x8x8xf32> -> vector<2x8x32xf32>
    %c0_47 = arith.constant 0 : index
    %c0_48 = arith.constant 0 : index
    %c0_49 = arith.constant 0 : index
    %112 = vector.load %arg15[%c0_47, %c0_48, %c0_49] : memref<2x8x32xf32, #tpu.memory_space<vmem>>, vector<2x8x32xf32>
    tpu.vector_store %arg15[%c0_47, %c0_48, %c0_49], %111 {strides = array<i32>} : memref<2x8x32xf32, #tpu.memory_space<vmem>>, vector<2x8x32xf32>,
    %113 = tpu.concatenate %47, %68, %89, %110 in 2 : vector<2x8x8xf32>, vector<2x8x8xf32>, vector<2x8x8xf32>, vector<2x8x8xf32> -> vector<2x8x32xf32>
    %114 = vector.shape_cast %113 : vector<2x8x32xf32> to vector<16x32xf32>
    %c0_50 = arith.constant 0 : index
    %c0_51 = arith.constant 0 : index
    %115 = vector.load %arg10[%c0_50, %c0_51] : memref<32x32xf32, #tpu.memory_space<vmem>>, vector<32x32xf32>
    %cst_52 = arith.constant dense<0.000000e+00> : vector<16x32xf32>
    %116 = tpu.matmul %114, %115, %cst_52 {dimension_numbers = #tpu.dot_dimension_numbers<[1], [0], [0], [1], [0, 0, 1, 1], [], []>} : vector<16x32xf32>, vector<32x32xf32>, vector<16x32xf32> -> vector<16x32xf32>
    %c0_53 = arith.constant 0 : index
    %c0_54 = arith.constant 0 : index
    %117 = vector.load %arg11[%c0_53, %c0_54] : memref<1x32xf32, #tpu.memory_space<vmem>>, vector<1x32xf32>
    %118 = vector.broadcast %117 : vector<1x32xf32> to vector<16x32xf32>
    %119 = arith.addf %116, %118 : vector<16x32xf32>
    %120 = arith.addf %119, %1 : vector<16x32xf32>
    %cst_55 = arith.constant dense<0.000000e+00> : vector<16xf32>
    %121 = vector.multi_reduction <add>, %120, %cst_55 [1] : vector<16x32xf32> to vector<16xf32>
    %122 = vector.shape_cast %121 : vector<16xf32> to vector<16x1xf32>
    %cst_56 = arith.constant 3.200000e+01 : f32
    %123 = vector.broadcast %cst_56 : f32 to vector<16x1xf32>
    %124 = arith.divf %122, %123 : vector<16x1xf32>
    %125 = vector.broadcast %124 : vector<16x1xf32> to vector<16x32xf32>
    %126 = arith.subf %120, %125 : vector<16x32xf32>
    %127 = arith.mulf %126, %126 : vector<16x32xf32>
    %cst_57 = arith.constant dense<0.000000e+00> : vector<16xf32>
    %128 = vector.multi_reduction <add>, %127, %cst_57 [1] : vector<16x32xf32> to vector<16xf32>
    %129 = vector.shape_cast %128 : vector<16xf32> to vector<16x1xf32>
    %cst_58 = arith.constant 3.200000e+01 : f32
    %130 = vector.broadcast %cst_58 : f32 to vector<16x1xf32>
    %131 = arith.divf %129, %130 : vector<16x1xf32>
    %132 = vector.broadcast %124 : vector<16x1xf32> to vector<16x32xf32>
    %133 = arith.subf %120, %132 : vector<16x32xf32>
    %cst_59 = arith.constant 9.99999997E-7 : f32
    %134 = vector.broadcast %cst_59 : f32 to vector<16x1xf32>
    %135 = arith.addf %131, %134 : vector<16x1xf32>
    %136 = math.rsqrt %135 : vector<16x1xf32>
    %137 = vector.broadcast %136 : vector<16x1xf32> to vector<16x32xf32>
    %138 = arith.mulf %133, %137 : vector<16x32xf32>
    %c0_60 = arith.constant 0 : index
    %c0_61 = arith.constant 0 : index
    %139 = vector.load %arg12[%c0_60, %c0_61] : memref<1x32xf32, #tpu.memory_space<vmem>>, vector<1x32xf32>
    %140 = vector.broadcast %139 : vector<1x32xf32> to vector<16x32xf32>
    %141 = arith.mulf %138, %140 : vector<16x32xf32>
    %c0_62 = arith.constant 0 : index
    %c0_63 = arith.constant 0 : index
    %142 = vector.load %arg13[%c0_62, %c0_63] : memref<1x32xf32, #tpu.memory_space<vmem>>, vector<1x32xf32>
    %143 = vector.broadcast %142 : vector<1x32xf32> to vector<16x32xf32>
    %144 = arith.addf %141, %143 : vector<16x32xf32>
    %145 = vector.shape_cast %144 : vector<16x32xf32> to vector<2x8x32xf32>
    %c0_64 = arith.constant 0 : index
    %c0_65 = arith.constant 0 : index
    %c0_66 = arith.constant 0 : index
    %146 = vector.load %arg14[%c0_64, %c0_65, %c0_66] : memref<2x8x32xf32, #tpu.memory_space<vmem>>, vector<2x8x32xf32>
    tpu.vector_store %arg14[%c0_64, %c0_65, %c0_66], %145 {strides = array<i32>} : memref<2x8x32xf32, #tpu.memory_space<vmem>>, vector<2x8x32xf32>,
    return
  }
}

</mosaic_0001>

<llo_original>
// kernel: tpu_custom_call.1
$region0: #{tpu_custom_call.1}
  #allocation0 [shape = 'u32[]', space=smem, size = 0x4, offset = 0x4, fixed_abs, tag = 'smem constant byte address 0x4 - core index']
  #allocation1 [shape = 'u32[72,128]{1,0:T(1,128)}', space=vmem, size = 0x9000, scoped, tag = 'internal scratch']
  %s0 = inlined_call_operand.hbm [shape: f32[2,8,32], index: 0, kind: input, shape index: {}]
  %s1 = inlined_call_operand.hbm [shape: f32[2,8,32], index: 1, kind: input, shape index: {}]
  %s2 = inlined_call_operand.hbm [shape: f32[2,8,32], index: 2, kind: input, shape index: {}]
  %s3 = inlined_call_operand.hbm [shape: s32[2,8,8], index: 3, kind: input, shape index: {}]
  %s4 = inlined_call_operand.hbm [shape: f32[32,32], index: 4, kind: input, shape index: {}]
  %s5 = inlined_call_operand.vmem [shape: f32[1,32], index: 5, kind: input, shape index: {}]
  %s6 = inlined_call_operand.hbm [shape: f32[32,32], index: 6, kind: input, shape index: {}]
  %s7 = inlined_call_operand.vmem [shape: f32[1,32], index: 7, kind: input, shape index: {}]
  %s8 = inlined_call_operand.hbm [shape: f32[32,32], index: 8, kind: input, shape index: {}]
  %s9 = inlined_call_operand.vmem [shape: f32[1,32], index: 9, kind: input, shape index: {}]
  %s10 = inlined_call_operand.hbm [shape: f32[32,32], index: 10, kind: input, shape index: {}]
  %s11 = inlined_call_operand.vmem [shape: f32[1,32], index: 11, kind: input, shape index: {}]
  %s12 = inlined_call_operand.vmem [shape: f32[1,32], index: 12, kind: input, shape index: {}]
  %s13 = inlined_call_operand.vmem [shape: f32[1,32], index: 13, kind: input, shape index: {}]
  %s14 = inlined_call_operand.hbm [shape: f32[2,8,32], index: 14, kind: output, shape index: {0}]
  %s15 = inlined_call_operand.hbm [shape: f32[2,8,32], index: 15, kind: output, shape index: {1}]
  %16 = xla_tuple %s14, %s15
  %s17 = sld [smem:[#allocation0]]
  $region106: #{tpu_custom_call.1} parent=0
    _
  %s19 = ssub.s32 1, %s17
  %s20 = scalar_select 0, %s19, %s17
  $region1: #{tpu_custom_call.1} parent=0
    #allocation2 [shape = 'u8[8192]{0}', space=vmem, size = 0x2000, scoped, tag = 'input window, operand 0, single buffered']
    #allocation3 [shape = 's32[1]{0}', space=sflag, size = 0x4, scoped, tag = 'scoped memory for tpu_custom_call.1']
    #allocation4 [shape = 's32[1]{0}', space=sflag, size = 0x4, scoped, tag = 'scoped memory for tpu_custom_call.1']
    #allocation5 [shape = 'u8[8192]{0}', space=vmem, size = 0x2000, scoped, tag = 'input window, operand 1, single buffered']
    #allocation6 [shape = 's32[1]{0}', space=sflag, size = 0x4, scoped, tag = 'scoped memory for tpu_custom_call.1']
    #allocation7 [shape = 'u8[8192]{0}', space=vmem, size = 0x2000, scoped, tag = 'input window, operand 2, single buffered']
    #allocation8 [shape = 'u8[8192]{0}', space=vmem, size = 0x2000, scoped, tag = 'input window, operand 3, single buffered']
    #allocation9 [shape = 's32[1]{0}', space=sflag, size = 0x4, scoped, tag = 'scoped memory for tpu_custom_call.1']
    #allocation10 [shape = 'u8[16384]{0}', space=vmem, size = 0x4000, scoped, tag = 'input window, operand 4, single buffered']
    #allocation11 [shape = 'u8[16384]{0}', space=vmem, size = 0x4000, scoped, tag = 'input window, operand 6, single buffered']
    #allocation12 [shape = 's32[1]{0}', space=sflag, size = 0x4, scoped, tag = 'scoped memory for tpu_custom_call.1']
    #allocation13 [shape = 'u8[16384]{0}', space=vmem, size = 0x4000, scoped, tag = 'input window, operand 8, single buffered']
    #allocation14 [shape = 'u8[16384]{0}', space=vmem, size = 0x4000, scoped, tag = 'input window, operand 10, single buffered']
    #allocation15 [shape = 's32[1]{0}', space=sflag, size = 0x4, scoped, tag = 'scoped memory for tpu_custom_call.1']
    #allocation16 [shape = 'u8[8192]{0}', space=vmem, size = 0x2000, scoped, tag = 'output window, operand 0, single buffered']
    #allocation17 [shape = 'u8[8192]{0}', space=vmem, size = 0x2000, scoped, tag = 'output window, operand 1, single buffered']
    #allocation18 [shape = 's32[1]{0}', space=sflag, size = 0x4, scoped, tag = 'scoped memory for tpu_custom_call.1']
    %21 = vsyncpa [#allocation3], 0
    %22 = vsyncpa [#allocation6], 0
    %23 = vsyncpa [#allocation9], 0
    %24 = vsyncpa [#allocation12], 0
    %25 = vsyncpa [#allocation15], 0
    %26 = vsyncpa [#allocation4], 0
    %27 = vsyncpa [#allocation18], 0
    // Predicated region
    $region2: #{tpu_custom_call.1} parent=1 // pred_check
      _
    $region3: #{tpu_custom_call.1} parent=1 // pred_check_branch
      %29 = sbr.rel (0) target = $region5
    $region4: #{tpu_custom_call.1} parent=1 // pred_region
      %31 = vsyncadd [#allocation3], 0
      %s32 = sshll.u32 %s0, 4
      %s33 = int_to_ptr.hbm [resolvable:$true] %s32
      %s34 = sshll.u32 [#allocation2], 4
      %s35 = int_to_ptr.vmem [resolvable:$true] %s34
      %40 = dma.hbm_to_vmem [thread:$0]  %s33, 256, %s35, [#allocation3], 128, 128, 8
    $region5: #{tpu_custom_call.1} parent=1 // pred_fallthru
      _
    // Predicated region
    $region6: #{tpu_custom_call.1} parent=1 // pred_check
      _
    $region7: #{tpu_custom_call.1} parent=1 // pred_check_branch
      %42 = sbr.rel (0) target = $region9
    $region8: #{tpu_custom_call.1} parent=1 // pred_region
      %44 = vsyncadd [#allocation6], 0
      %s45 = sshll.u32 %s1, 4
      %s46 = int_to_ptr.hbm [resolvable:$true] %s45
      %s47 = sshll.u32 [#allocation5], 4
      %s48 = int_to_ptr.vmem [resolvable:$true] %s47
      %53 = dma.hbm_to_vmem [thread:$0]  %s46, 256, %s48, [#allocation6], 128, 128, 8
    $region9: #{tpu_custom_call.1} parent=1 // pred_fallthru
      _
    // Predicated region
    $region10: #{tpu_custom_call.1} parent=1 // pred_check
      _
    $region11: #{tpu_custom_call.1} parent=1 // pred_check_branch
      %55 = sbr.rel (0) target = $region13
    $region12: #{tpu_custom_call.1} parent=1 // pred_region
      %57 = vsyncadd [#allocation6], 0
      %s58 = sshll.u32 %s2, 4
      %s59 = int_to_ptr.hbm [resolvable:$true] %s58
      %s60 = sshll.u32 [#allocation7], 4
      %s61 = int_to_ptr.vmem [resolvable:$true] %s60
      %66 = dma.hbm_to_vmem [thread:$0]  %s59, 256, %s61, [#allocation6], 128, 128, 8
    $region13: #{tpu_custom_call.1} parent=1 // pred_fallthru
      _
    // Predicated region
    $region14: #{tpu_custom_call.1} parent=1 // pred_check
      _
    $region15: #{tpu_custom_call.1} parent=1 // pred_check_branch
      %68 = sbr.rel (0) target = $region17
    $region16: #{tpu_custom_call.1} parent=1 // pred_region
      %70 = vsyncadd [#allocation9], 0
      %s71 = sshll.u32 %s3, 4
      %s72 = int_to_ptr.hbm [resolvable:$true] %s71
      %s73 = sshll.u32 [#allocation8], 4
      %s74 = int_to_ptr.vmem [resolvable:$true] %s73
      %79 = dma.hbm_to_vmem [thread:$0]  %s72, 256, %s74, [#allocation9], 128, 128, 8
    $region17: #{tpu_custom_call.1} parent=1 // pred_fallthru
      _
    // Predicated region
    $region18: #{tpu_custom_call.1} parent=1 // pred_check
      _
    $region19: #{tpu_custom_call.1} parent=1 // pred_check_branch
      %81 = sbr.rel (0) target = $region21
    $region20: #{tpu_custom_call.1} parent=1 // pred_region
      %83 = vsyncadd [#allocation9], 0
      %s84 = sshll.u32 %s4, 4
      %s85 = int_to_ptr.hbm [resolvable:$true] %s84
      %s86 = sshll.u32 [#allocation10], 4
      %s87 = int_to_ptr.vmem [resolvable:$true] %s86
      %92 = dma.hbm_to_vmem [thread:$0]  %s85, 512, %s87, [#allocation9], 128, 128, 8
    $region21: #{tpu_custom_call.1} parent=1 // pred_fallthru
      _
    // Predicated region
    $region22: #{tpu_custom_call.1} parent=1 // pred_check
      _
    $region23: #{tpu_custom_call.1} parent=1 // pred_check_branch
      %94 = sbr.rel (0) target = $region25
    $region24: #{tpu_custom_call.1} parent=1 // pred_region
      _
    $region25: #{tpu_custom_call.1} parent=1 // pred_fallthru
      _
    // Predicated region
    $region26: #{tpu_custom_call.1} parent=1 // pred_check
      _
    $region27: #{tpu_custom_call.1} parent=1 // pred_check_branch
      %96 = sbr.rel (0) target = $region29
    $region28: #{tpu_custom_call.1} parent=1 // pred_region
      %98 = vsyncadd [#allocation12], 0
      %s99 = sshll.u32 %s6, 4
      %s100 = int_to_ptr.hbm [resolvable:$true] %s99
      %s101 = sshll.u32 [#allocation11], 4
      %s102 = int_to_ptr.vmem [resolvable:$true] %s101
      %107 = dma.hbm_to_vmem [thread:$0]  %s100, 512, %s102, [#allocation12], 128, 128, 8
    $region29: #{tpu_custom_call.1} parent=1 // pred_fallthru
      _
    // Predicated region
    $region30: #{tpu_custom_call.1} parent=1 // pred_check
      _
    $region31: #{tpu_custom_call.1} parent=1 // pred_check_branch
      %109 = sbr.rel (0) target = $region33
    $region32: #{tpu_custom_call.1} parent=1 // pred_region
      _
    $region33: #{tpu_custom_call.1} parent=1 // pred_fallthru
      _
    // Predicated region
    $region34: #{tpu_custom_call.1} parent=1 // pred_check
      _
    $region35: #{tpu_custom_call.1} parent=1 // pred_check_branch
      %111 = sbr.rel (0) target = $region37
    $region36: #{tpu_custom_call.1} parent=1 // pred_region
      %113 = vsyncadd [#allocation12], 0
      %s114 = sshll.u32 %s8, 4
      %s115 = int_to_ptr.hbm [resolvable:$true] %s114
      %s116 = sshll.u32 [#allocation13], 4
      %s117 = int_to_ptr.vmem [resolvable:$true] %s116
      %122 = dma.hbm_to_vmem [thread:$0]  %s115, 512, %s117, [#allocation12], 128, 128, 8
    $region37: #{tpu_custom_call.1} parent=1 // pred_fallthru
      _
    // Predicated region
    $region38: #{tpu_custom_call.1} parent=1 // pred_check
      _
    $region39: #{tpu_custom_call.1} parent=1 // pred_check_branch
      %124 = sbr.rel (0) target = $region41
    $region40: #{tpu_custom_call.1} parent=1 // pred_region
      _
    $region41: #{tpu_custom_call.1} parent=1 // pred_fallthru
      _
    // Predicated region
    $region42: #{tpu_custom_call.1} parent=1 // pred_check
      _
    $region43: #{tpu_custom_call.1} parent=1 // pred_check_branch
      %126 = sbr.rel (0) target = $region45
    $region44: #{tpu_custom_call.1} parent=1 // pred_region
      %128 = vsyncadd [#allocation15], 0
      %s129 = sshll.u32 %s10, 4
      %s130 = int_to_ptr.hbm [resolvable:$true] %s129
      %s131 = sshll.u32 [#allocation14], 4
      %s132 = int_to_ptr.vmem [resolvable:$true] %s131
      %137 = dma.hbm_to_vmem [thread:$0]  %s130, 512, %s132, [#allocation15], 128, 128, 8
    $region45: #{tpu_custom_call.1} parent=1 // pred_fallthru
      _
    // Predicated region
    $region46: #{tpu_custom_call.1} parent=1 // pred_check
      _
    $region47: #{tpu_custom_call.1} parent=1 // pred_check_branch
      %139 = sbr.rel (0) target = $region49
    $region48: #{tpu_custom_call.1} parent=1 // pred_region
      _
    $region49: #{tpu_custom_call.1} parent=1 // pred_fallthru
      _
    // Predicated region
    $region50: #{tpu_custom_call.1} parent=1 // pred_check
      _
    $region51: #{tpu_custom_call.1} parent=1 // pred_check_branch
      %141 = sbr.rel (0) target = $region53
    $region52: #{tpu_custom_call.1} parent=1 // pred_region
      _
    $region53: #{tpu_custom_call.1} parent=1 // pred_fallthru
      _
    // Predicated region
    $region54: #{tpu_custom_call.1} parent=1 // pred_check
      _
    $region55: #{tpu_custom_call.1} parent=1 // pred_check_branch
      %143 = sbr.rel (0) target = $region57
    $region56: #{tpu_custom_call.1} parent=1 // pred_region
      _
    $region57: #{tpu_custom_call.1} parent=1 // pred_fallthru
      _
    // Predicated region
    $region58: #{tpu_custom_call.1} parent=1 // pred_check
      _
    $region59: #{tpu_custom_call.1} parent=1 // pred_check_branch
      %145 = sbr.rel (0) target = $region61
    $region60: #{tpu_custom_call.1} parent=1 // pred_region
      %147 = dma.done [#allocation3], 256
    $region61: #{tpu_custom_call.1} parent=1 // pred_fallthru
      _
    // Predicated region
    $region62: #{tpu_custom_call.1} parent=1 // pred_check
      _
    $region63: #{tpu_custom_call.1} parent=1 // pred_check_branch
      %149 = sbr.rel (0) target = $region65
    $region64: #{tpu_custom_call.1} parent=1 // pred_region
      %151 = dma.done [#allocation6], 256
    $region65: #{tpu_custom_call.1} parent=1 // pred_fallthru
      _
    // Predicated region
    $region66: #{tpu_custom_call.1} parent=1 // pred_check
      _
    $region67: #{tpu_custom_call.1} parent=1 // pred_check_branch
      %153 = sbr.rel (0) target = $region69
    $region68: #{tpu_custom_call.1} parent=1 // pred_region
      %155 = dma.done [#allocation6], 256
    $region69: #{tpu_custom_call.1} parent=1 // pred_fallthru
      _
    // Predicated region
    $region70: #{tpu_custom_call.1} parent=1 // pred_check
      _
    $region71: #{tpu_custom_call.1} parent=1 // pred_check_branch
      %157 = sbr.rel (0) target = $region73
    $region72: #{tpu_custom_call.1} parent=1 // pred_region
      %159 = dma.done [#allocation9], 256
    $region73: #{tpu_custom_call.1} parent=1 // pred_fallthru
      _
    // Predicated region
    $region74: #{tpu_custom_call.1} parent=1 // pred_check
      _
    $region75: #{tpu_custom_call.1} parent=1 // pred_check_branch
      %161 = sbr.rel (0) target = $region77
    $region76: #{tpu_custom_call.1} parent=1 // pred_region
      %163 = dma.done [#allocation9], 512
    $region77: #{tpu_custom_call.1} parent=1 // pred_fallthru
      _
    // Predicated region
    $region78: #{tpu_custom_call.1} parent=1 // pred_check
      _
    $region79: #{tpu_custom_call.1} parent=1 // pred_check_branch
      %165 = sbr.rel (0) target = $region81
    $region80: #{tpu_custom_call.1} parent=1 // pred_region
      %167 = dma.done [#allocation12], 512
    $region81: #{tpu_custom_call.1} parent=1 // pred_fallthru
      _
    // Predicated region
    $region82: #{tpu_custom_call.1} parent=1 // pred_check
      _
    $region83: #{tpu_custom_call.1} parent=1 // pred_check_branch
      %169 = sbr.rel (0) target = $region85
    $region84: #{tpu_custom_call.1} parent=1 // pred_region
      %171 = dma.done [#allocation12], 512
    $region85: #{tpu_custom_call.1} parent=1 // pred_fallthru
      _
    // Predicated region
    $region86: #{tpu_custom_call.1} parent=1 // pred_check
      _
    $region87: #{tpu_custom_call.1} parent=1 // pred_check_branch
      %173 = sbr.rel (0) target = $region89
    $region88: #{tpu_custom_call.1} parent=1 // pred_region
      %175 = dma.done [#allocation15], 512
    $region89: #{tpu_custom_call.1} parent=1 // pred_fallthru
      _
    %v176 = vld [vmem:[#allocation2] sm:$0xff]
    %v177 = vld [vmem:[#allocation2 + $0x8] sm:$0xff]
    %v178 = vld [vmem:[#allocation5] sm:$0xff]
    %v179 = vld [vmem:[#allocation5 + $0x8] sm:$0xff]
    %v180 = vld [vmem:[#allocation7] sm:$0xff]
    %v181 = vld [vmem:[#allocation7 + $0x8] sm:$0xff]
    %v182 = vld [vmem:[#allocation10] sm:$0xff]
    %v183 = vld [vmem:[#allocation10 + $0x8] sm:$0xff]
    %v184 = vld [vmem:[#allocation10 + $0x10] sm:$0xff]
    %v185 = vld [vmem:[#allocation10 + $0x18] sm:$0xff]
    %v186 = vld [vmem:[%s5] sm:$0x1]
    %v188 = vperm.slane %v186, 0
    %vm190 = vcmask 261120
    %v192 = vsel %vm190, %v176, 0
    %v195 = vsel %vm190, %v177, 0
    %197 = vmatpush.msra.mxu0 0.0
    %198 = vmatpush.msra.mxu0 0.0
    %199 = vmatpush.msra.mxu0 0.0
    %200 = vmatpush.msra.mxu0 0.0
    %201 = vmatpush.msra.mxu0 0.0
    %202 = vmatpush.msra.mxu0 0.0
    %203 = vmatpush.msra.mxu0 0.0
    %204 = vmatpush.msra.mxu0 0.0
    %205 = vmatpush.msra.mxu0 0.0
    %206 = vmatpush.msra.mxu0 0.0
    %207 = vmatpush.msra.mxu0 0.0
    %208 = vmatpush.msra.mxu0 0.0
    %209 = vmatpush.msra.mxu0 %v185
    %210 = vmatpush.msra.mxu0 %v184
    %211 = vmatpush.msra.mxu0 %v183
    %212 = vmatpush.msra.mxu0 %v182
    %213 = vmatmul.f32.gmra.mxu0 %v192
    %v214 = vpop.f32.mrf.mxu0
    %v215 = vadd.f32 %v188, %v214
    %216 = vmatmul.f32.gmra.mxu0 %v195
    %v217 = vpop.f32.mrf.mxu0
    %v218 = vadd.f32 %v188, %v217
    %219 = vdwg.mxu0
    %v220 = vld [vmem:[#allocation11] sm:$0xff]
    %v221 = vld [vmem:[#allocation11 + $0x8] sm:$0xff]
    %v222 = vld [vmem:[#allocation11 + $0x10] sm:$0xff]
    %v223 = vld [vmem:[#allocation11 + $0x18] sm:$0xff]
    %v224 = vld [vmem:[%s7] sm:$0x1]
    %v226 = vperm.slane %v224, 0
    %v229 = vsel %vm190, %v178, 0
    %v232 = vsel %vm190, %v179, 0
    %234 = vmatpush.msra.mxu0 0.0
    %235 = vmatpush.msra.mxu0 0.0
    %236 = vmatpush.msra.mxu0 0.0
    %237 = vmatpush.msra.mxu0 0.0
    %238 = vmatpush.msra.mxu0 0.0
    %239 = vmatpush.msra.mxu0 0.0
    %240 = vmatpush.msra.mxu0 0.0
    %241 = vmatpush.msra.mxu0 0.0
    %242 = vmatpush.msra.mxu0 0.0
    %243 = vmatpush.msra.mxu0 0.0
    %244 = vmatpush.msra.mxu0 0.0
    %245 = vmatpush.msra.mxu0 0.0
    %246 = vmatpush.msra.mxu0 %v223
    %247 = vmatpush.msra.mxu0 %v222
    %248 = vmatpush.msra.mxu0 %v221
    %249 = vmatpush.msra.mxu0 %v220
    %250 = vmatmul.f32.gmra.mxu0 %v229
    %v251 = vpop.f32.mrf.mxu0
    %v252 = vadd.f32 %v226, %v251
    %253 = vmatmul.f32.gmra.mxu0 %v232
    %v254 = vpop.f32.mrf.mxu0
    %v255 = vadd.f32 %v226, %v254
    %256 = vdwg.mxu0
    %v257 = vld [vmem:[#allocation13] sm:$0xff]
    %v258 = vld [vmem:[#allocation13 + $0x8] sm:$0xff]
    %v259 = vld [vmem:[#allocation13 + $0x10] sm:$0xff]
    %v260 = vld [vmem:[#allocation13 + $0x18] sm:$0xff]
    %v261 = vld [vmem:[%s9] sm:$0x1]
    %v263 = vperm.slane %v261, 0
    %v266 = vsel %vm190, %v180, 0
    %v269 = vsel %vm190, %v181, 0
    %271 = vmatpush.msra.mxu0 0.0
    %272 = vmatpush.msra.mxu0 0.0
    %273 = vmatpush.msra.mxu0 0.0
    %274 = vmatpush.msra.mxu0 0.0
    %275 = vmatpush.msra.mxu0 0.0
    %276 = vmatpush.msra.mxu0 0.0
    %277 = vmatpush.msra.mxu0 0.0
    %278 = vmatpush.msra.mxu0 0.0
    %279 = vmatpush.msra.mxu0 0.0
    %280 = vmatpush.msra.mxu0 0.0
    %281 = vmatpush.msra.mxu0 0.0
    %282 = vmatpush.msra.mxu0 0.0
    %283 = vmatpush.msra.mxu0 %v260
    %284 = vmatpush.msra.mxu0 %v259
    %285 = vmatpush.msra.mxu0 %v258
    %286 = vmatpush.msra.mxu0 %v257
    %287 = vmatmul.f32.gmra.mxu0 %v266
    %v288 = vpop.f32.mrf.mxu0
    %v289 = vadd.f32 %v263, %v288
    %290 = vmatmul.f32.gmra.mxu0 %v269
    %v291 = vpop.f32.mrf.mxu0
    %v292 = vadd.f32 %v263, %v291
    %293 = vdwg.mxu0
    %v294 = vld [vmem:[#allocation8] sm:$0xff]
    %v295 = vld [vmem:[#allocation8 + $0x8] sm:$0xff]
    %vm296 = vcmp.eq.s32.totalorder %v294, 0
    %vm297 = vcmp.eq.s32.totalorder %v295, 0
    %v298 = vsel %vm296, -1e+09, 0.0
    %v299 = vsel %vm297, -1e+09, 0.0
    %vm300 = vcmask 64512
    %v302 = vsel %vm300, %v215, 0
    %v305 = vsel %vm300, %v252, 0
    %307 = vmatpush.xpose.msra.mxu0 0.0
    %308 = vmatpush.xpose.msra.mxu0 0.0
    %309 = vmatpush.xpose.msra.mxu0 0.0
    %310 = vmatpush.xpose.msra.mxu0 0.0
    %311 = vmatpush.xpose.msra.mxu0 0.0
    %312 = vmatpush.xpose.msra.mxu0 0.0
    %313 = vmatpush.xpose.msra.mxu0 0.0
    %314 = vmatpush.xpose.msra.mxu0 0.0
    %315 = vmatpush.xpose.msra.mxu0 0.0
    %316 = vmatpush.xpose.msra.mxu0 0.0
    %317 = vmatpush.xpose.msra.mxu0 0.0
    %318 = vmatpush.xpose.msra.mxu0 0.0
    %319 = vmatpush.xpose.msra.mxu0 0.0
    %320 = vmatpush.xpose.msra.mxu0 0.0
    %321 = vmatpush.xpose.msra.mxu0 0.0
    %322 = vmatpush.xpose.msra.mxu0 %v305
    %323 = vmatmul.f32.gmra.mxu0 %v302
    %v324 = vpop.f32.mrf.mxu0
    %v325 = vadd.f32 0.0, %v324
    %326 = vdwg.mxu0
    %v328 = vsel %vm300, %v218, 0
    %v331 = vsel %vm300, %v255, 0
    %333 = vmatpush.xpose.msra.mxu0 0.0
    %334 = vmatpush.xpose.msra.mxu0 0.0
    %335 = vmatpush.xpose.msra.mxu0 0.0
    %336 = vmatpush.xpose.msra.mxu0 0.0
    %337 = vmatpush.xpose.msra.mxu0 0.0
    %338 = vmatpush.xpose.msra.mxu0 0.0
    %339 = vmatpush.xpose.msra.mxu0 0.0
    %340 = vmatpush.xpose.msra.mxu0 0.0
    %341 = vmatpush.xpose.msra.mxu0 0.0
    %342 = vmatpush.xpose.msra.mxu0 0.0
    %343 = vmatpush.xpose.msra.mxu0 0.0
    %344 = vmatpush.xpose.msra.mxu0 0.0
    %345 = vmatpush.xpose.msra.mxu0 0.0
    %346 = vmatpush.xpose.msra.mxu0 0.0
    %347 = vmatpush.xpose.msra.mxu0 0.0
    %348 = vmatpush.xpose.msra.mxu0 %v331
    %349 = vmatmul.f32.gmra.mxu0 %v328
    %v350 = vpop.f32.mrf.mxu0
    %v351 = vadd.f32 0.0, %v350
    %352 = vdwg.mxu0
    %v353 = vmul.f32 %v325, 0.35355338
    %v354 = vmul.f32 %v351, 0.35355338
    %v355 = vadd.f32 %v353, %v298
    %v356 = vadd.f32 %v354, %v299
    %v357 = vsel %vm300, %v355, -inf
    %358 = vmax.xlane.f32.xlu0 %v357
    %v359 = vpop.xlane.xlu0 %358
    %v360 = vsel %vm300, %v356, -inf
    %361 = vmax.xlane.f32.xlu0 %v360
    %v362 = vpop.xlane.xlu0 %361
    %v363 = vsub.f32 %v355, %v359
    %v364 = vsub.f32 %v356, %v362
    %v365 = vmul.f32 %v363, 1.442695
    %v366 = vpow.pop %v365
    %v367 = vmul.f32 %v364, 1.442695
    %v368 = vpow.pop %v367
    %v369 = vsel %vm300, %v366, 0.0
    %370 = vadd.xlane.f32.xlu0 %v369
    %v371 = vpop.xlane.xlu0 %370
    %v372 = vsel %vm300, %v368, 0.0
    %373 = vadd.xlane.f32.xlu0 %v372
    %v374 = vpop.xlane.xlu0 %373
    %v375 = vrcp.pop %v371
    %v376 = vmul.f32 %v371, %v375
    %v377 = vsub.f32 1.0, %v376
    %v378 = vmul.f32 %v375, %v377
    %v379 = vadd.f32 %v375, %v378
    %vm380 = vweird.f32 %v371
    %vm381 = vweird.f32 %v375
    %vm382 = vmor %vm380, %vm381
    %v383 = vsel %vm382, %v375, %v379
    %v384 = vand.u32 2147483647, %v371
    %vm385 = vcmp.eq.f32.partialorder %v384, 8.507059e+37
    %v386 = vand.u32 %v371, 2147483648
    %v387 = vor.u32 1.1754944e-38, %v386
    %v388 = vsel %vm385, %v387, %v383
    %v389 = vrcp.pop %v374
    %v390 = vmul.f32 %v374, %v389
    %v391 = vsub.f32 1.0, %v390
    %v392 = vmul.f32 %v389, %v391
    %v393 = vadd.f32 %v389, %v392
    %vm394 = vweird.f32 %v374
    %vm395 = vweird.f32 %v389
    %vm396 = vmor %vm394, %vm395
    %v397 = vsel %vm396, %v389, %v393
    %v398 = vand.u32 2147483647, %v374
    %vm399 = vcmp.eq.f32.partialorder %v398, 8.507059e+37
    %v400 = vand.u32 %v374, 2147483648
    %v401 = vor.u32 1.1754944e-38, %v400
    %v402 = vsel %vm399, %v401, %v397
    %v403 = vmul.f32 %v366, %v388
    %v404 = vmul.f32 %v368, %v402
    %v406 = vsel %vm300, %v403, 0
    %408 = vmatpush.msra.mxu0 0.0
    %409 = vmatpush.msra.mxu0 0.0
    %410 = vmatpush.msra.mxu0 0.0
    %411 = vmatpush.msra.mxu0 0.0
    %412 = vmatpush.msra.mxu0 0.0
    %413 = vmatpush.msra.mxu0 0.0
    %414 = vmatpush.msra.mxu0 0.0
    %415 = vmatpush.msra.mxu0 0.0
    %416 = vmatpush.msra.mxu0 0.0
    %417 = vmatpush.msra.mxu0 0.0
    %418 = vmatpush.msra.mxu0 0.0
    %419 = vmatpush.msra.mxu0 0.0
    %420 = vmatpush.msra.mxu0 0.0
    %421 = vmatpush.msra.mxu0 0.0
    %422 = vmatpush.msra.mxu0 0.0
    %423 = vmatpush.msra.mxu0 %v289
    %424 = vmatmul.f32.gmra.mxu0 %v406
    %v425 = vpop.f32.mrf.mxu0
    %v426 = vadd.f32 0.0, %v425
    %427 = vdwg.mxu0
    %v429 = vsel %vm300, %v404, 0
    %431 = vmatpush.msra.mxu0 0.0
    %432 = vmatpush.msra.mxu0 0.0
    %433 = vmatpush.msra.mxu0 0.0
    %434 = vmatpush.msra.mxu0 0.0
    %435 = vmatpush.msra.mxu0 0.0
    %436 = vmatpush.msra.mxu0 0.0
    %437 = vmatpush.msra.mxu0 0.0
    %438 = vmatpush.msra.mxu0 0.0
    %439 = vmatpush.msra.mxu0 0.0
    %440 = vmatpush.msra.mxu0 0.0
    %441 = vmatpush.msra.mxu0 0.0
    %442 = vmatpush.msra.mxu0 0.0
    %443 = vmatpush.msra.mxu0 0.0
    %444 = vmatpush.msra.mxu0 0.0
    %445 = vmatpush.msra.mxu0 0.0
    %446 = vmatpush.msra.mxu0 %v292
    %447 = vmatmul.f32.gmra.mxu0 %v429
    %v448 = vpop.f32.mrf.mxu0
    %v449 = vadd.f32 0.0, %v448
    %450 = vdwg.mxu0
    %451 = vrot.lane.b32.xlu0 %v215, 120
    %v452 = vpop.permute.xlu0 %451
    %453 = vrot.lane.b32.xlu0 %v252, 120
    %v454 = vpop.permute.xlu0 %453
    %v455 = vsel %vm300, %v452, 0
    %v457 = vsel %vm300, %v454, 0
    %459 = vmatpush.xpose.msra.mxu0 0.0
    %460 = vmatpush.xpose.msra.mxu0 0.0
    %461 = vmatpush.xpose.msra.mxu0 0.0
    %462 = vmatpush.xpose.msra.mxu0 0.0
    %463 = vmatpush.xpose.msra.mxu0 0.0
    %464 = vmatpush.xpose.msra.mxu0 0.0
    %465 = vmatpush.xpose.msra.mxu0 0.0
    %466 = vmatpush.xpose.msra.mxu0 0.0
    %467 = vmatpush.xpose.msra.mxu0 0.0
    %468 = vmatpush.xpose.msra.mxu0 0.0
    %469 = vmatpush.xpose.msra.mxu0 0.0
    %470 = vmatpush.xpose.msra.mxu0 0.0
    %471 = vmatpush.xpose.msra.mxu0 0.0
    %472 = vmatpush.xpose.msra.mxu0 0.0
    %473 = vmatpush.xpose.msra.mxu0 0.0
    %474 = vmatpush.xpose.msra.mxu0 %v457
    %475 = vmatmul.f32.gmra.mxu0 %v455
    %v476 = vpop.f32.mrf.mxu0
    %v477 = vadd.f32 0.0, %v476
    %478 = vdwg.mxu0
    %479 = vrot.lane.b32.xlu0 %v218, 120
    %v480 = vpop.permute.xlu0 %479
    %481 = vrot.lane.b32.xlu0 %v255, 120
    %v482 = vpop.permute.xlu0 %481
    %v483 = vsel %vm300, %v480, 0
    %v485 = vsel %vm300, %v482, 0
    %487 = vmatpush.xpose.msra.mxu0 0.0
    %488 = vmatpush.xpose.msra.mxu0 0.0
    %489 = vmatpush.xpose.msra.mxu0 0.0
    %490 = vmatpush.xpose.msra.mxu0 0.0
    %491 = vmatpush.xpose.msra.mxu0 0.0
    %492 = vmatpush.xpose.msra.mxu0 0.0
    %493 = vmatpush.xpose.msra.mxu0 0.0
    %494 = vmatpush.xpose.msra.mxu0 0.0
    %495 = vmatpush.xpose.msra.mxu0 0.0
    %496 = vmatpush.xpose.msra.mxu0 0.0
    %497 = vmatpush.xpose.msra.mxu0 0.0
    %498 = vmatpush.xpose.msra.mxu0 0.0
    %499 = vmatpush.xpose.msra.mxu0 0.0
    %500 = vmatpush.xpose.msra.mxu0 0.0
    %501 = vmatpush.xpose.msra.mxu0 0.0
    %502 = vmatpush.xpose.msra.mxu0 %v485
    %503 = vmatmul.f32.gmra.mxu0 %v483
    %v504 = vpop.f32.mrf.mxu0
    %v505 = vadd.f32 0.0, %v504
    %506 = vdwg.mxu0
    %v507 = vmul.f32 %v477, 0.35355338
    %v508 = vmul.f32 %v505, 0.35355338
    %v509 = vadd.f32 %v507, %v298
    %v510 = vadd.f32 %v508, %v299
    %v511 = vsel %vm300, %v509, -inf
    %512 = vmax.xlane.f32.xlu0 %v511
    %v513 = vpop.xlane.xlu0 %512
    %v514 = vsel %vm300, %v510, -inf
    %515 = vmax.xlane.f32.xlu0 %v514
    %v516 = vpop.xlane.xlu0 %515
    %v517 = vsub.f32 %v509, %v513
    %v518 = vsub.f32 %v510, %v516
    %v519 = vmul.f32 %v517, 1.442695
    %v520 = vpow.pop %v519
    %v521 = vmul.f32 %v518, 1.442695
    %v522 = vpow.pop %v521
    %v523 = vsel %vm300, %v520, 0.0
    %524 = vadd.xlane.f32.xlu0 %v523
    %v525 = vpop.xlane.xlu0 %524
    %v526 = vsel %vm300, %v522, 0.0
    %527 = vadd.xlane.f32.xlu0 %v526
    %v528 = vpop.xlane.xlu0 %527
    %v529 = vrcp.pop %v525
    %v530 = vmul.f32 %v525, %v529
    %v531 = vsub.f32 1.0, %v530
    %v532 = vmul.f32 %v529, %v531
    %v533 = vadd.f32 %v529, %v532
    %vm534 = vweird.f32 %v525
    %vm535 = vweird.f32 %v529
    %vm536 = vmor %vm534, %vm535
    %v537 = vsel %vm536, %v529, %v533
    %v538 = vand.u32 2147483647, %v525
    %vm539 = vcmp.eq.f32.partialorder %v538, 8.507059e+37
    %v540 = vand.u32 %v525, 2147483648
    %v541 = vor.u32 1.1754944e-38, %v540
    %v542 = vsel %vm539, %v541, %v537
    %v543 = vrcp.pop %v528
    %v544 = vmul.f32 %v528, %v543
    %v545 = vsub.f32 1.0, %v544
    %v546 = vmul.f32 %v543, %v545
    %v547 = vadd.f32 %v543, %v546
    %vm548 = vweird.f32 %v528
    %vm549 = vweird.f32 %v543
    %vm550 = vmor %vm548, %vm549
    %v551 = vsel %vm550, %v543, %v547
    %v552 = vand.u32 2147483647, %v528
    %vm553 = vcmp.eq.f32.partialorder %v552, 8.507059e+37
    %v554 = vand.u32 %v528, 2147483648
    %v555 = vor.u32 1.1754944e-38, %v554
    %v556 = vsel %vm553, %v555, %v551
    %v557 = vmul.f32 %v520, %v542
    %v558 = vmul.f32 %v522, %v556
    %560 = vrot.lane.b32.xlu0 %v289, 120
    %v561 = vpop.permute.xlu0 %560
    %v564 = vsel %vm300, %v557, 0
    %566 = vmatpush.msra.mxu0 0.0
    %567 = vmatpush.msra.mxu0 0.0
    %568 = vmatpush.msra.mxu0 0.0
    %569 = vmatpush.msra.mxu0 0.0
    %570 = vmatpush.msra.mxu0 0.0
    %571 = vmatpush.msra.mxu0 0.0
    %572 = vmatpush.msra.mxu0 0.0
    %573 = vmatpush.msra.mxu0 0.0
    %574 = vmatpush.msra.mxu0 0.0
    %575 = vmatpush.msra.mxu0 0.0
    %576 = vmatpush.msra.mxu0 0.0
    %577 = vmatpush.msra.mxu0 0.0
    %578 = vmatpush.msra.mxu0 0.0
    %579 = vmatpush.msra.mxu0 0.0
    %580 = vmatpush.msra.mxu0 0.0
    %581 = vmatpush.msra.mxu0 %v561
    %582 = vmatmul.f32.gmra.mxu0 %v564
    %v583 = vpop.f32.mrf.mxu0
    %v584 = vadd.f32 0.0, %v583
    %585 = vdwg.mxu0
    %587 = vrot.lane.b32.xlu0 %v292, 120
    %v588 = vpop.permute.xlu0 %587
    %v591 = vsel %vm300, %v558, 0
    %593 = vmatpush.msra.mxu0 0.0
    %594 = vmatpush.msra.mxu0 0.0
    %595 = vmatpush.msra.mxu0 0.0
    %596 = vmatpush.msra.mxu0 0.0
    %597 = vmatpush.msra.mxu0 0.0
    %598 = vmatpush.msra.mxu0 0.0
    %599 = vmatpush.msra.mxu0 0.0
    %600 = vmatpush.msra.mxu0 0.0
    %601 = vmatpush.msra.mxu0 0.0
    %602 = vmatpush.msra.mxu0 0.0
    %603 = vmatpush.msra.mxu0 0.0
    %604 = vmatpush.msra.mxu0 0.0
    %605 = vmatpush.msra.mxu0 0.0
    %606 = vmatpush.msra.mxu0 0.0
    %607 = vmatpush.msra.mxu0 0.0
    %608 = vmatpush.msra.mxu0 %v588
    %609 = vmatmul.f32.gmra.mxu0 %v591
    %v610 = vpop.f32.mrf.mxu0
    %v611 = vadd.f32 0.0, %v610
    %612 = vdwg.mxu0
    %613 = vrot.lane.b32.xlu0 %v215, 112
    %v614 = vpop.permute.xlu0 %613
    %615 = vrot.lane.b32.xlu0 %v252, 112
    %v616 = vpop.permute.xlu0 %615
    %v617 = vsel %vm300, %v614, 0
    %v619 = vsel %vm300, %v616, 0
    %621 = vmatpush.xpose.msra.mxu0 0.0
    %622 = vmatpush.xpose.msra.mxu0 0.0
    %623 = vmatpush.xpose.msra.mxu0 0.0
    %624 = vmatpush.xpose.msra.mxu0 0.0
    %625 = vmatpush.xpose.msra.mxu0 0.0
    %626 = vmatpush.xpose.msra.mxu0 0.0
    %627 = vmatpush.xpose.msra.mxu0 0.0
    %628 = vmatpush.xpose.msra.mxu0 0.0
    %629 = vmatpush.xpose.msra.mxu0 0.0
    %630 = vmatpush.xpose.msra.mxu0 0.0
    %631 = vmatpush.xpose.msra.mxu0 0.0
    %632 = vmatpush.xpose.msra.mxu0 0.0
    %633 = vmatpush.xpose.msra.mxu0 0.0
    %634 = vmatpush.xpose.msra.mxu0 0.0
    %635 = vmatpush.xpose.msra.mxu0 0.0
    %636 = vmatpush.xpose.msra.mxu0 %v619
    %637 = vmatmul.f32.gmra.mxu0 %v617
    %v638 = vpop.f32.mrf.mxu0
    %v639 = vadd.f32 0.0, %v638
    %640 = vdwg.mxu0
    %641 = vrot.lane.b32.xlu0 %v218, 112
    %v642 = vpop.permute.xlu0 %641
    %643 = vrot.lane.b32.xlu0 %v255, 112
    %v644 = vpop.permute.xlu0 %643
    %v645 = vsel %vm300, %v642, 0
    %v647 = vsel %vm300, %v644, 0
    %649 = vmatpush.xpose.msra.mxu0 0.0
    %650 = vmatpush.xpose.msra.mxu0 0.0
    %651 = vmatpush.xpose.msra.mxu0 0.0
    %652 = vmatpush.xpose.msra.mxu0 0.0
    %653 = vmatpush.xpose.msra.mxu0 0.0
    %654 = vmatpush.xpose.msra.mxu0 0.0
    %655 = vmatpush.xpose.msra.mxu0 0.0
    %656 = vmatpush.xpose.msra.mxu0 0.0
    %657 = vmatpush.xpose.msra.mxu0 0.0
    %658 = vmatpush.xpose.msra.mxu0 0.0
    %659 = vmatpush.xpose.msra.mxu0 0.0
    %660 = vmatpush.xpose.msra.mxu0 0.0
    %661 = vmatpush.xpose.msra.mxu0 0.0
    %662 = vmatpush.xpose.msra.mxu0 0.0
    %663 = vmatpush.xpose.msra.mxu0 0.0
    %664 = vmatpush.xpose.msra.mxu0 %v647
    %665 = vmatmul.f32.gmra.mxu0 %v645
    %v666 = vpop.f32.mrf.mxu0
    %v667 = vadd.f32 0.0, %v666
    %668 = vdwg.mxu0
    %v669 = vmul.f32 %v639, 0.35355338
    %v670 = vmul.f32 %v667, 0.35355338
    %v671 = vadd.f32 %v669, %v298
    %v672 = vadd.f32 %v670, %v299
    %v673 = vsel %vm300, %v671, -inf
    %674 = vmax.xlane.f32.xlu0 %v673
    %v675 = vpop.xlane.xlu0 %674
    %v676 = vsel %vm300, %v672, -inf
    %677 = vmax.xlane.f32.xlu0 %v676
    %v678 = vpop.xlane.xlu0 %677
    %v679 = vsub.f32 %v671, %v675
    %v680 = vsub.f32 %v672, %v678
    %v681 = vmul.f32 %v679, 1.442695
    %v682 = vpow.pop %v681
    %v683 = vmul.f32 %v680, 1.442695
    %v684 = vpow.pop %v683
    %v685 = vsel %vm300, %v682, 0.0
    %686 = vadd.xlane.f32.xlu0 %v685
    %v687 = vpop.xlane.xlu0 %686
    %v688 = vsel %vm300, %v684, 0.0
    %689 = vadd.xlane.f32.xlu0 %v688
    %v690 = vpop.xlane.xlu0 %689
    %v691 = vrcp.pop %v687
    %v692 = vmul.f32 %v687, %v691
    %v693 = vsub.f32 1.0, %v692
    %v694 = vmul.f32 %v691, %v693
    %v695 = vadd.f32 %v691, %v694
    %vm696 = vweird.f32 %v687
    %vm697 = vweird.f32 %v691
    %vm698 = vmor %vm696, %vm697
    %v699 = vsel %vm698, %v691, %v695
    %v700 = vand.u32 2147483647, %v687
    %vm701 = vcmp.eq.f32.partialorder %v700, 8.507059e+37
    %v702 = vand.u32 %v687, 2147483648
    %v703 = vor.u32 1.1754944e-38, %v702
    %v704 = vsel %vm701, %v703, %v699
    %v705 = vrcp.pop %v690
    %v706 = vmul.f32 %v690, %v705
    %v707 = vsub.f32 1.0, %v706
    %v708 = vmul.f32 %v705, %v707
    %v709 = vadd.f32 %v705, %v708
    %vm710 = vweird.f32 %v690
    %vm711 = vweird.f32 %v705
    %vm712 = vmor %vm710, %vm711
    %v713 = vsel %vm712, %v705, %v709
    %v714 = vand.u32 2147483647, %v690
    %vm715 = vcmp.eq.f32.partialorder %v714, 8.507059e+37
    %v716 = vand.u32 %v690, 2147483648
    %v717 = vor.u32 1.1754944e-38, %v716
    %v718 = vsel %vm715, %v717, %v713
    %v719 = vmul.f32 %v682, %v704
    %v720 = vmul.f32 %v684, %v718
    %721 = vrot.lane.b32.xlu0 %v289, 112
    %v722 = vpop.permute.xlu0 %721
    %v725 = vsel %vm300, %v719, 0
    %727 = vmatpush.msra.mxu0 0.0
    %728 = vmatpush.msra.mxu0 0.0
    %729 = vmatpush.msra.mxu0 0.0
    %730 = vmatpush.msra.mxu0 0.0
    %731 = vmatpush.msra.mxu0 0.0
    %732 = vmatpush.msra.mxu0 0.0
    %733 = vmatpush.msra.mxu0 0.0
    %734 = vmatpush.msra.mxu0 0.0
    %735 = vmatpush.msra.mxu0 0.0
    %736 = vmatpush.msra.mxu0 0.0
    %737 = vmatpush.msra.mxu0 0.0
    %738 = vmatpush.msra.mxu0 0.0
    %739 = vmatpush.msra.mxu0 0.0
    %740 = vmatpush.msra.mxu0 0.0
    %741 = vmatpush.msra.mxu0 0.0
    %742 = vmatpush.msra.mxu0 %v722
    %743 = vmatmul.f32.gmra.mxu0 %v725
    %v744 = vpop.f32.mrf.mxu0
    %v745 = vadd.f32 0.0, %v744
    %746 = vdwg.mxu0
    %747 = vrot.lane.b32.xlu0 %v292, 112
    %v748 = vpop.permute.xlu0 %747
    %v751 = vsel %vm300, %v720, 0
    %753 = vmatpush.msra.mxu0 0.0
    %754 = vmatpush.msra.mxu0 0.0
    %755 = vmatpush.msra.mxu0 0.0
    %756 = vmatpush.msra.mxu0 0.0
    %757 = vmatpush.msra.mxu0 0.0
    %758 = vmatpush.msra.mxu0 0.0
    %759 = vmatpush.msra.mxu0 0.0
    %760 = vmatpush.msra.mxu0 0.0
    %761 = vmatpush.msra.mxu0 0.0
    %762 = vmatpush.msra.mxu0 0.0
    %763 = vmatpush.msra.mxu0 0.0
    %764 = vmatpush.msra.mxu0 0.0
    %765 = vmatpush.msra.mxu0 0.0
    %766 = vmatpush.msra.mxu0 0.0
    %767 = vmatpush.msra.mxu0 0.0
    %768 = vmatpush.msra.mxu0 %v748
    %769 = vmatmul.f32.gmra.mxu0 %v751
    %v770 = vpop.f32.mrf.mxu0
    %v771 = vadd.f32 0.0, %v770
    %772 = vdwg.mxu0
    %773 = vrot.lane.b32.xlu0 %v215, 104
    %v774 = vpop.permute.xlu0 %773
    %775 = vrot.lane.b32.xlu0 %v252, 104
    %v776 = vpop.permute.xlu0 %775
    %v777 = vsel %vm300, %v774, 0
    %v779 = vsel %vm300, %v776, 0
    %781 = vmatpush.xpose.msra.mxu0 0.0
    %782 = vmatpush.xpose.msra.mxu0 0.0
    %783 = vmatpush.xpose.msra.mxu0 0.0
    %784 = vmatpush.xpose.msra.mxu0 0.0
    %785 = vmatpush.xpose.msra.mxu0 0.0
    %786 = vmatpush.xpose.msra.mxu0 0.0
    %787 = vmatpush.xpose.msra.mxu0 0.0
    %788 = vmatpush.xpose.msra.mxu0 0.0
    %789 = vmatpush.xpose.msra.mxu0 0.0
    %790 = vmatpush.xpose.msra.mxu0 0.0
    %791 = vmatpush.xpose.msra.mxu0 0.0
    %792 = vmatpush.xpose.msra.mxu0 0.0
    %793 = vmatpush.xpose.msra.mxu0 0.0
    %794 = vmatpush.xpose.msra.mxu0 0.0
    %795 = vmatpush.xpose.msra.mxu0 0.0
    %796 = vmatpush.xpose.msra.mxu0 %v779
    %797 = vmatmul.f32.gmra.mxu0 %v777
    %v798 = vpop.f32.mrf.mxu0
    %v799 = vadd.f32 0.0, %v798
    %800 = vdwg.mxu0
    %801 = vrot.lane.b32.xlu0 %v218, 104
    %v802 = vpop.permute.xlu0 %801
    %803 = vrot.lane.b32.xlu0 %v255, 104
    %v804 = vpop.permute.xlu0 %803
    %v805 = vsel %vm300, %v802, 0
    %v807 = vsel %vm300, %v804, 0
    %809 = vmatpush.xpose.msra.mxu0 0.0
    %810 = vmatpush.xpose.msra.mxu0 0.0
    %811 = vmatpush.xpose.msra.mxu0 0.0
    %812 = vmatpush.xpose.msra.mxu0 0.0
    %813 = vmatpush.xpose.msra.mxu0 0.0
    %814 = vmatpush.xpose.msra.mxu0 0.0
    %815 = vmatpush.xpose.msra.mxu0 0.0
    %816 = vmatpush.xpose.msra.mxu0 0.0
    %817 = vmatpush.xpose.msra.mxu0 0.0
    %818 = vmatpush.xpose.msra.mxu0 0.0
    %819 = vmatpush.xpose.msra.mxu0 0.0
    %820 = vmatpush.xpose.msra.mxu0 0.0
    %821 = vmatpush.xpose.msra.mxu0 0.0
    %822 = vmatpush.xpose.msra.mxu0 0.0
    %823 = vmatpush.xpose.msra.mxu0 0.0
    %824 = vmatpush.xpose.msra.mxu0 %v807
    %825 = vmatmul.f32.gmra.mxu0 %v805
    %v826 = vpop.f32.mrf.mxu0
    %v827 = vadd.f32 0.0, %v826
    %828 = vdwg.mxu0
    %v829 = vmul.f32 %v799, 0.35355338
    %v830 = vmul.f32 %v827, 0.35355338
    %v831 = vadd.f32 %v829, %v298
    %v832 = vadd.f32 %v830, %v299
    %v833 = vsel %vm300, %v831, -inf
    %834 = vmax.xlane.f32.xlu0 %v833
    %v835 = vpop.xlane.xlu0 %834
    %v836 = vsel %vm300, %v832, -inf
    %837 = vmax.xlane.f32.xlu0 %v836
    %v838 = vpop.xlane.xlu0 %837
    %v839 = vsub.f32 %v831, %v835
    %v840 = vsub.f32 %v832, %v838
    %v841 = vmul.f32 %v839, 1.442695
    %v842 = vpow.pop %v841
    %v843 = vmul.f32 %v840, 1.442695
    %v844 = vpow.pop %v843
    %v845 = vsel %vm300, %v842, 0.0
    %846 = vadd.xlane.f32.xlu0 %v845
    %v847 = vpop.xlane.xlu0 %846
    %v848 = vsel %vm300, %v844, 0.0
    %849 = vadd.xlane.f32.xlu0 %v848
    %v850 = vpop.xlane.xlu0 %849
    %v851 = vrcp.pop %v847
    %v852 = vmul.f32 %v847, %v851
    %v853 = vsub.f32 1.0, %v852
    %v854 = vmul.f32 %v851, %v853
    %v855 = vadd.f32 %v851, %v854
    %vm856 = vweird.f32 %v847
    %vm857 = vweird.f32 %v851
    %vm858 = vmor %vm856, %vm857
    %v859 = vsel %vm858, %v851, %v855
    %v860 = vand.u32 2147483647, %v847
    %vm861 = vcmp.eq.f32.partialorder %v860, 8.507059e+37
    %v862 = vand.u32 %v847, 2147483648
    %v863 = vor.u32 1.1754944e-38, %v862
    %v864 = vsel %vm861, %v863, %v859
    %v865 = vrcp.pop %v850
    %v866 = vmul.f32 %v850, %v865
    %v867 = vsub.f32 1.0, %v866
    %v868 = vmul.f32 %v865, %v867
    %v869 = vadd.f32 %v865, %v868
    %vm870 = vweird.f32 %v850
    %vm871 = vweird.f32 %v865
    %vm872 = vmor %vm870, %vm871
    %v873 = vsel %vm872, %v865, %v869
    %v874 = vand.u32 2147483647, %v850
    %vm875 = vcmp.eq.f32.partialorder %v874, 8.507059e+37
    %v876 = vand.u32 %v850, 2147483648
    %v877 = vor.u32 1.1754944e-38, %v876
    %v878 = vsel %vm875, %v877, %v873
    %v879 = vmul.f32 %v842, %v864
    %v880 = vmul.f32 %v844, %v878
    %881 = vrot.lane.b32.xlu0 %v289, 104
    %v882 = vpop.permute.xlu0 %881
    %v885 = vsel %vm300, %v879, 0
    %887 = vmatpush.msra.mxu0 0.0
    %888 = vmatpush.msra.mxu0 0.0
    %889 = vmatpush.msra.mxu0 0.0
    %890 = vmatpush.msra.mxu0 0.0
    %891 = vmatpush.msra.mxu0 0.0
    %892 = vmatpush.msra.mxu0 0.0
    %893 = vmatpush.msra.mxu0 0.0
    %894 = vmatpush.msra.mxu0 0.0
    %895 = vmatpush.msra.mxu0 0.0
    %896 = vmatpush.msra.mxu0 0.0
    %897 = vmatpush.msra.mxu0 0.0
    %898 = vmatpush.msra.mxu0 0.0
    %899 = vmatpush.msra.mxu0 0.0
    %900 = vmatpush.msra.mxu0 0.0
    %901 = vmatpush.msra.mxu0 0.0
    %902 = vmatpush.msra.mxu0 %v882
    %903 = vmatmul.f32.gmra.mxu0 %v885
    %v904 = vpop.f32.mrf.mxu0
    %v905 = vadd.f32 0.0, %v904
    %906 = vdwg.mxu0
    %907 = vrot.lane.b32.xlu0 %v292, 104
    %v908 = vpop.permute.xlu0 %907
    %v911 = vsel %vm300, %v880, 0
    %913 = vmatpush.msra.mxu0 0.0
    %914 = vmatpush.msra.mxu0 0.0
    %915 = vmatpush.msra.mxu0 0.0
    %916 = vmatpush.msra.mxu0 0.0
    %917 = vmatpush.msra.mxu0 0.0
    %918 = vmatpush.msra.mxu0 0.0
    %919 = vmatpush.msra.mxu0 0.0
    %920 = vmatpush.msra.mxu0 0.0
    %921 = vmatpush.msra.mxu0 0.0
    %922 = vmatpush.msra.mxu0 0.0
    %923 = vmatpush.msra.mxu0 0.0
    %924 = vmatpush.msra.mxu0 0.0
    %925 = vmatpush.msra.mxu0 0.0
    %926 = vmatpush.msra.mxu0 0.0
    %927 = vmatpush.msra.mxu0 0.0
    %928 = vmatpush.msra.mxu0 %v908
    %929 = vmatmul.f32.gmra.mxu0 %v911
    %v930 = vpop.f32.mrf.mxu0
    %v931 = vadd.f32 0.0, %v930
    %932 = vdwg.mxu0
    %933 = vrot.lane.b32.xlu0 %v557, 8
    %v934 = vpop.permute.xlu0 %933
    %935 = vrot.lane.b32.xlu0 %v558, 8
    %v936 = vpop.permute.xlu0 %935
    %939 = vrot.lane.b32.xlu0 %v719, 16
    %v940 = vpop.permute.xlu0 %939
    %941 = vrot.lane.b32.xlu0 %v720, 16
    %v942 = vpop.permute.xlu0 %941
    %945 = vrot.lane.b32.xlu0 %v879, 24
    %v946 = vpop.permute.xlu0 %945
    %947 = vrot.lane.b32.xlu0 %v880, 24
    %v948 = vpop.permute.xlu0 %947
    %v951 = vsel %vm300, %v403, %v934
    %v952 = vsel %vm300, %v404, %v936
    %vm953 = vcmask 130048
    %v954 = vsel %vm953, %v951, %v940
    %v955 = vsel %vm953, %v952, %v942
    %vm956 = vcmask 195584
    %v957 = vsel %vm956, %v954, %v946
    %v958 = vsel %vm956, %v955, %v948
    %959 = vst.msk [vmem:[#allocation17] sm:$0xff] %vm190, %v957
    %960 = vst.msk [vmem:[#allocation17 + $0x8] sm:$0xff] %vm190, %v958
    %963 = vrot.lane.b32.xlu0 %v584, 8
    %v964 = vpop.permute.xlu0 %963
    %965 = vrot.lane.b32.xlu0 %v611, 8
    %v966 = vpop.permute.xlu0 %965
    %971 = vrot.lane.b32.xlu0 %v745, 16
    %v972 = vpop.permute.xlu0 %971
    %973 = vrot.lane.b32.xlu0 %v771, 16
    %v974 = vpop.permute.xlu0 %973
    %979 = vrot.lane.b32.xlu0 %v905, 24
    %v980 = vpop.permute.xlu0 %979
    %981 = vrot.lane.b32.xlu0 %v931, 24
    %v982 = vpop.permute.xlu0 %981
    %v985 = vsel %vm300, %v426, %v964
    %v986 = vsel %vm300, %v449, %v966
    %v987 = vsel %vm953, %v985, %v972
    %v988 = vsel %vm953, %v986, %v974
    %v989 = vsel %vm956, %v987, %v980
    %v990 = vsel %vm956, %v988, %v982
    %v991 = vld [vmem:[#allocation14] sm:$0xff]
    %v992 = vld [vmem:[#allocation14 + $0x8] sm:$0xff]
    %v993 = vld [vmem:[#allocation14 + $0x10] sm:$0xff]
    %v994 = vld [vmem:[#allocation14 + $0x18] sm:$0xff]
    %v995 = vld [vmem:[%s11] sm:$0x1]
    %v997 = vperm.slane %v995, 0
    %v1000 = vsel %vm190, %v989, 0
    %v1003 = vsel %vm190, %v990, 0
    %1005 = vmatpush.msra.mxu0 0.0
    %1006 = vmatpush.msra.mxu0 0.0
    %1007 = vmatpush.msra.mxu0 0.0
    %1008 = vmatpush.msra.mxu0 0.0
    %1009 = vmatpush.msra.mxu0 0.0
    %1010 = vmatpush.msra.mxu0 0.0
    %1011 = vmatpush.msra.mxu0 0.0
    %1012 = vmatpush.msra.mxu0 0.0
    %1013 = vmatpush.msra.mxu0 0.0
    %1014 = vmatpush.msra.mxu0 0.0
    %1015 = vmatpush.msra.mxu0 0.0
    %1016 = vmatpush.msra.mxu0 0.0
    %1017 = vmatpush.msra.mxu0 %v994
    %1018 = vmatpush.msra.mxu0 %v993
    %1019 = vmatpush.msra.mxu0 %v992
    %1020 = vmatpush.msra.mxu0 %v991
    %1021 = vmatmul.f32.gmra.mxu0 %v1000
    %v1022 = vpop.f32.mrf.mxu0
    %v1023 = vadd.f32 %v997, %v1022
    %1024 = vmatmul.f32.gmra.mxu0 %v1003
    %v1025 = vpop.f32.mrf.mxu0
    %v1026 = vadd.f32 %v997, %v1025
    %1027 = vdwg.mxu0
    %v1028 = vadd.f32 %v1023, %v176
    %v1029 = vadd.f32 %v1026, %v177
    %v1030 = vsel %vm190, %v1028, 0.0
    %1031 = vadd.xlane.f32.xlu0 %v1030
    %v1032 = vpop.xlane.xlu0 %1031
    %v1033 = vsel %vm190, %v1029, 0.0
    %1034 = vadd.xlane.f32.xlu0 %v1033
    %v1035 = vpop.xlane.xlu0 %1034
    %v1036 = vrcp.pop 32.0
    %v1037 = vmul.f32 32.0, %v1036
    %v1038 = vsub.f32 1.0, %v1037
    %v1039 = vmul.f32 %v1036, %v1038
    %v1040 = vadd.f32 %v1036, %v1039
    %vm1041 = vweird.f32 %v1036
    %v1042 = vsel %vm1041, %v1036, %v1040
    %v1043 = vmul.f32 %v1032, %v1042
    %v1044 = vmul.f32 %v1035, %v1042
    %v1045 = vsub.f32 %v1028, %v1043
    %v1046 = vsub.f32 %v1029, %v1044
    %v1047 = vmul.f32 %v1045, %v1045
    %v1048 = vmul.f32 %v1046, %v1046
    %v1049 = vsel %vm190, %v1047, 0.0
    %1050 = vadd.xlane.f32.xlu0 %v1049
    %v1051 = vpop.xlane.xlu0 %1050
    %v1052 = vsel %vm190, %v1048, 0.0
    %1053 = vadd.xlane.f32.xlu0 %v1052
    %v1054 = vpop.xlane.xlu0 %1053
    %v1055 = vmul.f32 %v1051, %v1042
    %v1056 = vmul.f32 %v1054, %v1042
    %v1057 = vadd.f32 %v1055, 1e-06
    %v1058 = vadd.f32 %v1056, 1e-06
    %v1059 = vrsqrt.pop %v1057
    %v1060 = vmul.f32 %v1059, %v1057
    %v1061 = vmul.f32 %v1060, %v1059
    %v1062 = vmul.f32 0.5, %v1061
    %v1063 = vsub.f32 1.5, %v1062
    %v1064 = vmul.f32 %v1059, %v1063
    %vm1065 = vweird.f32 %v1057
    %vm1066 = vweird.f32 %v1059
    %vm1067 = vmor %vm1065, %vm1066
    %v1068 = vsel %vm1067, %v1059, %v1064
    %v1069 = vrsqrt.pop %v1058
    %v1070 = vmul.f32 %v1069, %v1058
    %v1071 = vmul.f32 %v1070, %v1069
    %v1072 = vmul.f32 0.5, %v1071
    %v1073 = vsub.f32 1.5, %v1072
    %v1074 = vmul.f32 %v1069, %v1073
    %vm1075 = vweird.f32 %v1058
    %vm1076 = vweird.f32 %v1069
    %vm1077 = vmor %vm1075, %vm1076
    %v1078 = vsel %vm1077, %v1069, %v1074
    %v1079 = vmul.f32 %v1045, %v1068
    %v1080 = vmul.f32 %v1046, %v1078
    %v1081 = vld [vmem:[%s12] sm:$0x1]
    %v1083 = vperm.slane %v1081, 0
    %v1085 = vmul.f32 %v1079, %v1083
    %v1086 = vmul.f32 %v1080, %v1083
    %v1087 = vld [vmem:[%s13] sm:$0x1]
    %v1089 = vperm.slane %v1087, 0
    %v1091 = vadd.f32 %v1085, %v1089
    %v1092 = vadd.f32 %v1086, %v1089
    %1093 = vst.msk [vmem:[#allocation16] sm:$0xff] %vm190, %v1091
    %1094 = vst.msk [vmem:[#allocation16 + $0x8] sm:$0xff] %vm190, %v1092
    // Predicated region
    $region90: #{tpu_custom_call.1} parent=1 // pred_check
      _
    $region91: #{tpu_custom_call.1} parent=1 // pred_check_branch
      %1096 = sbr.rel (0) target = $region93
    $region92: #{tpu_custom_call.1} parent=1 // pred_region
      %1098 = vsyncadd [#allocation4], 0
      %s1099 = sshll.u32 [#allocation16], 4
      %s1100 = int_to_ptr.vmem [resolvable:$true] %s1099
      %s1101 = sshll.u32 %s14, 4
      %s1102 = int_to_ptr.hbm [resolvable:$true] %s1101
      %1107 = dma.vmem_to_hbm [thread:$0]  %s1100, 256, %s1102, [#allocation4], 128, 128, 8
    $region93: #{tpu_custom_call.1} parent=1 // pred_fallthru
      _
    // Predicated region
    $region94: #{tpu_custom_call.1} parent=1 // pred_check
      _
    $region95: #{tpu_custom_call.1} parent=1 // pred_check_branch
      %1109 = sbr.rel (0) target = $region97
    $region96: #{tpu_custom_call.1} parent=1 // pred_region
      %1111 = vsyncadd [#allocation18], 0
      %s1112 = sshll.u32 [#allocation17], 4
      %s1113 = int_to_ptr.vmem [resolvable:$true] %s1112
      %s1114 = sshll.u32 %s15, 4
      %s1115 = int_to_ptr.hbm [resolvable:$true] %s1114
      %1120 = dma.vmem_to_hbm [thread:$0]  %s1113, 256, %s1115, [#allocation18], 128, 128, 8
    $region97: #{tpu_custom_call.1} parent=1 // pred_fallthru
      _
    // Predicated region
    $region98: #{tpu_custom_call.1} parent=1 // pred_check
      _
    $region99: #{tpu_custom_call.1} parent=1 // pred_check_branch
      %1122 = sbr.rel (0) target = $region101
    $region100: #{tpu_custom_call.1} parent=1 // pred_region
      %1124 = dma.done [#allocation4], 256
    $region101: #{tpu_custom_call.1} parent=1 // pred_fallthru
      _
    // Predicated region
    $region102: #{tpu_custom_call.1} parent=1 // pred_check
      _
    $region103: #{tpu_custom_call.1} parent=1 // pred_check_branch
      %1126 = sbr.rel (0) target = $region105
    $region104: #{tpu_custom_call.1} parent=1 // pred_region
      %1128 = dma.done [#allocation18], 256
    $region105: #{tpu_custom_call.1} parent=1 // pred_fallthru
      _
    %1129 = vsyncpa [#allocation3], 1
    %1130 = vsyncpa [#allocation6], 1
    %1131 = vsyncpa [#allocation9], 1
    %1132 = vsyncpa [#allocation12], 1
    %1133 = vsyncpa [#allocation15], 1
    %1134 = vsyncpa [#allocation4], 1
    %1135 = vsyncpa [#allocation18], 1

</llo_original>
